<compile_context>
chip_gen: v6e
topology: v6e:2x2x1
jax: 0.10.0
libtpu: 0.0.40
codegen_flags: <defaults>
</compile_context>

<pallas_src>
import functools

import numpy as np
import jax
import jax.numpy as jnp
from jax.experimental import pallas as pl
from jax.experimental.pallas import tpu as pltpu


def _round_up(x, m):
    return ((x + m - 1) // m) * m


def _face_pool_kernel(img_ref, idx_ref, out_ref, acc_ref, cnt_ref, *, pool_type, ts):
    """img_ref: [tF, tN], idx_ref: [tN, 1] int32, out_ref: [tF, tS].

    acc_ref: [tF, tS] f32 running accumulator (sum or max), cnt_ref: [8, tS] f32 counts.
    Grid = (B, S_tiles, F_tiles, N_tiles); N (reduction) is the last / "arbitrary" axis.
    """
    s_tile = pl.program_id(1)
    n_tile = pl.program_id(3)
    n_last = pl.num_programs(3) - 1

    @pl.when(n_tile == 0)
    def _init():
        acc_ref[...] = jnp.zeros_like(acc_ref)
        if pool_type == "average":
            cnt_ref[...] = jnp.zeros_like(cnt_ref)

    img = img_ref[...]                                  # [tF, tN] (input dtype)
    idx = idx_ref[...]                                  # [tN, 1] int32
    tn = img.shape[1]

    # segment ids for this S tile, laid along lanes: 1 + s_tile*tS .. (s_tile+1)*tS
    seg = jax.lax.broadcasted_iota(jnp.int32, (tn, ts), 1) + (1 + s_tile * ts)
    match = idx == seg                                  # [tN, tS] bool

    if pool_type == "max":
        # masked-to-0 matches torch_scatter scatter_max(fill_value=0) semantics.
        masked = jnp.where(match[None, :, :], img[:, :, None].astype(jnp.float32), 0.0)
        acc_ref[...] = jnp.maximum(acc_ref[...], jnp.max(masked, axis=1))
    else:
        onehot = match.astype(img.dtype)                # exact in bf16 / f32
        acc_ref[...] += jnp.dot(img, onehot, preferred_element_type=jnp.float32)
        if pool_type == "average":
            ones = jnp.ones((8, tn), dtype=img.dtype)   # counts via MXU, not XLU reduce
            cnt_ref[...] += jnp.dot(ones, onehot, preferred_element_type=jnp.float32)

    @pl.when(n_tile == n_last)
    def _finalize():
        if pool_type == "average":
            denom = jnp.maximum(cnt_ref[0:1, :], 1.0)   # [1, tS], broadcast over sublanes
            out_ref[...] = (acc_ref[...] / denom).astype(out_ref.dtype)
        else:
            out_ref[...] = acc_ref[...].astype(out_ref.dtype)


def face_pooling(img, index, max_index, pool_type="max"):
    """img: [B, F, H, W] float, index: [B, H, W] int, returns [B, F, max_index]."""
    assert pool_type in ("max", "sum", "average")
    B, F, H, W = img.shape
    N = H * W
    S = int(max_index)
    assert S >= 1

    # ---- tile / padding derivation (per pool type) ---------------------------------
    F_pad = _round_up(F, 8)
    if pool_type == "max":
        tF = 8                       # bounds the [tF, tN, tS] select/max intermediate
        tS = 128
        n_cap = 256
    else:
        if F_pad <= 256:
            tF = F_pad
        else:
            tF = 256
            F_pad = _round_up(F_pad, 256)
        tS = 128 if S <= 128 else 256
        n_cap = 1024                 # deeper contraction per step for the MXU path

    S_pad = _round_up(S, tS)
    tN = min(n_cap, _round_up(N, 128))
    N_pad = _round_up(N, tN)

    # ---- layout: flatten spatial dims, pad (padded pixels carry segment id 0) -------
    img_flat = img.reshape(B, F, N)
    if F_pad != F or N_pad != N:
        img_flat = jnp.pad(img_flat, ((0, 0), (0, F_pad - F), (0, N_pad - N)))
    idx_flat = index.reshape(B, N).astype(jnp.int32)
    if N_pad != N:
        idx_flat = jnp.pad(idx_flat, ((0, 0), (0, N_pad - N)))  # pad with 0 -> ignored
    idx_flat = idx_flat.reshape(B, N_pad, 1)

    grid = (B, S_pad // tS, F_pad // tF, N_pad // tN)

    kernel = functools.partial(_face_pool_kernel, pool_type=pool_type, ts=tS)

    isz = jnp.dtype(img.dtype).itemsize
    cost = pl.CostEstimate(
        flops=2 * B * F_pad * N_pad * S_pad,
        transcendentals=0,
        bytes_accessed=B * (F_pad * N_pad * isz + N_pad * 4 + F_pad * S_pad * isz),
    )

    out = pl.pallas_call(
        kernel,
        out_shape=jax.ShapeDtypeStruct((B, F_pad, S_pad), img.dtype),
        grid=grid,
        in_specs=[
            pl.BlockSpec((None, tF, tN), lambda b, s, f, n: (b, f, n)),
            pl.BlockSpec((None, tN, 1), lambda b, s, f, n: (b, n, 0)),
        ],
        out_specs=pl.BlockSpec((None, tF, tS), lambda b, s, f, n: (b, f, s)),
        scratch_shapes=[
            pltpu.VMEM((tF, tS), jnp.float32),   # sum / max accumulator
            pltpu.VMEM((8, tS), jnp.float32),    # counts (used for "average")
        ],
        compiler_params=pltpu.CompilerParams(
            dimension_semantics=("parallel", "parallel", "parallel", "arbitrary"),
            vmem_limit_bytes=32 * 1024 * 1024,
        ),
        cost_estimate=cost,
    )(img_flat, idx_flat)

    # drop F / S padding (segment 0 was already dropped inside the kernel)
    return out[:, :F, :S]


def _ref_face_pooling(img, index, max_index, pool_type):
    """NumPy reference mirroring torch_scatter with fill_value=0, drop segment 0."""
    img = np.asarray(img, dtype=np.float32)
    index = np.asarray(index)
    B, F, H, W = img.shape
    N = H * W
    imgf = img.reshape(B, F, N)
    idxf = index.reshape(B, N)
    out = np.zeros((B, F, max_index + 1), np.float32)
    cnt = np.zeros((B, max_index + 1), np.float32)
    for b in range(B):
        for n in range(N):
            s = int(idxf[b, n])
            if pool_type == "max":
                out[b, :, s] = np.maximum(out[b, :, s], imgf[b, :, n])
            else:
                out[b, :, s] += imgf[b, :, n]
                cnt[b, s] += 1.0
    if pool_type == "average":
        out = out / np.maximum(cnt, 1.0)[:, None, :]
    return out[:, :, 1:]


if __name__ == "__main__":
    key = jax.random.PRNGKey(0)
    k_img, k_idx = jax.random.split(key)

    B, F, H, W = 2, 4, 16, 16
    max_index = 8

    img = jax.random.normal(k_img, (B, F, H, W), dtype=jnp.float32)
    index = jax.random.randint(k_idx, (B, H, W), 0, max_index + 1, dtype=jnp.int32)

    ok = True
    for pool_type in ("max", "sum", "average"):
        out = face_pooling(img, index, max_index, pool_type=pool_type)
        out = jax.block_until_ready(out)
        ref = _ref_face_pooling(img, index, max_index, pool_type)
        if out.shape != (B, F, max_index):
            ok = False
        if not np.allclose(np.asarray(out), ref, atol=1e-4, rtol=1e-4):
            ok = False

    if ok:
        print("KERNEL_OK")
</pallas_src>

<mosaic_0001>
module attributes {stable_mosaic.version = 11 : i64} {
  func.func @_face_pool_kernel(%arg0: i32, %arg1: i32, %arg2: i32, %arg3: i32, %arg4: memref<1x8x256xf32, #tpu.memory_space<vmem>>, %arg5: memref<1x256x1xi32, #tpu.memory_space<vmem>>, %arg6: memref<1x8x128xf32, #tpu.memory_space<vmem>>, %arg7: memref<8x128xf32, #tpu.memory_space<vmem>>, %arg8: memref<8x128xf32, #tpu.memory_space<vmem>>) attributes {dimension_semantics = [#tpu.dimension_semantics<parallel>, #tpu.dimension_semantics<parallel>, #tpu.dimension_semantics<parallel>, #tpu.dimension_semantics<arbitrary>], iteration_bounds = array<i64: 2, 1, 1, 1>, scalar_prefetch = 0 : i64, scratch_operands = 2 : i64, tpu.core_type = #tpu.core_type<tc>, window_params = [{transform_indices = @transform_0, window_bounds = array<i64: 1, 8, 256>}, {transform_indices = @transform_1, window_bounds = array<i64: 1, 256, 1>}, {transform_indices = @transform_2, window_bounds = array<i64: 1, 8, 128>}]} {
    %c0_i32 = arith.constant 0 : i32
    %0 = arith.cmpi eq, %arg3, %c0_i32 : i32
    %1 = arith.extui %0 : i1 to i32
    %c0_i32_0 = arith.constant 0 : i32
    %2 = arith.cmpi ne, %1, %c0_i32_0 : i32
    scf.if %2 {
      %cst_13 = arith.constant 0.000000e+00 : f32
      %29 = vector.broadcast %cst_13 : f32 to vector<8x128xf32>
      %c0_14 = arith.constant 0 : index
      %c0_15 = arith.constant 0 : index
      %30 = vector.load %arg7[%c0_14, %c0_15] : memref<8x128xf32, #tpu.memory_space<vmem>>, vector<8x128xf32>
      tpu.vector_store %arg7[%c0_14, %c0_15], %29 {strides = array<i32>} : memref<8x128xf32, #tpu.memory_space<vmem>>, vector<8x128xf32>,
    } else {
    }
    %c0 = arith.constant 0 : index
    %c0_1 = arith.constant 0 : index
    %c0_2 = arith.constant 0 : index
    %3 = vector.load %arg4[%c0, %c0_1, %c0_2] : memref<1x8x256xf32, #tpu.memory_space<vmem>>, vector<1x8x256xf32>
    %4 = vector.shape_cast %3 : vector<1x8x256xf32> to vector<8x256xf32>
    %c0_3 = arith.constant 0 : index
    %c0_4 = arith.constant 0 : index
    %c0_5 = arith.constant 0 : index
    %5 = vector.load %arg5[%c0_3, %c0_4, %c0_5] : memref<1x256x1xi32, #tpu.memory_space<vmem>>, vector<1x256x1xi32>
    %6 = vector.shape_cast %5 : vector<1x256x1xi32> to vector<256x1xi32>
    %7 = tpu.iota {dimensions = array<i32: 1>} : vector<256x128xi32>
    %c128_i32 = arith.constant 128 : i32
    %8 = arith.muli %arg1, %c128_i32 : i32
    %c1_i32 = arith.constant 1 : i32
    %9 = arith.addi %c1_i32, %8 : i32
    %10 = vector.broadcast %9 : i32 to vector<256x128xi32>
    %11 = arith.addi %7, %10 : vector<256x128xi32>
    %12 = vector.broadcast %6 : vector<256x1xi32> to vector<256x128xi32>
    %13 = arith.cmpi eq, %12, %11 : vector<256x128xi32>
    %14 = vector.shape_cast %13 : vector<256x128xi1> to vector<1x256x128xi1>
    %15 = vector.shape_cast %4 : vector<8x256xf32> to vector<8x256x1xf32>
    %cst = arith.constant 0.000000e+00 : f32
    %16 = vector.shape_cast %14 : vector<1x256x128xi1> to vector<1x256x128xi1>
    %17 = vector.broadcast %16 : vector<1x256x128xi1> to vector<8x256x128xi1>
    %18 = vector.shape_cast %15 : vector<8x256x1xf32> to vector<8x256x1xf32>
    %19 = vector.broadcast %18 : vector<8x256x1xf32> to vector<8x256x128xf32>
    %20 = vector.broadcast %cst : f32 to vector<8x256x128xf32>
    %21 = arith.select %17, %19, %20 : vector<8x256x128xi1>, vector<8x256x128xf32>
    %c0_6 = arith.constant 0 : index
    %c0_7 = arith.constant 0 : index
    %22 = vector.load %arg7[%c0_6, %c0_7] : memref<8x128xf32, #tpu.memory_space<vmem>>, vector<8x128xf32>
    %cst_8 = arith.constant dense<0xFF800000> : vector<8x128xf32>
    %23 = vector.multi_reduction <maximumf>, %21, %cst_8 [1] : vector<8x256x128xf32> to vector<8x128xf32>
    %24 = arith.maximumf %22, %23 : vector<8x128xf32>
    %c0_9 = arith.constant 0 : index
    %c0_10 = arith.constant 0 : index
    %25 = vector.load %arg7[%c0_9, %c0_10] : memref<8x128xf32, #tpu.memory_space<vmem>>, vector<8x128xf32>
    tpu.vector_store %arg7[%c0_9, %c0_10], %24 {strides = array<i32>} : memref<8x128xf32, #tpu.memory_space<vmem>>, vector<8x128xf32>,
    %c0_i32_11 = arith.constant 0 : i32
    %26 = arith.cmpi eq, %arg3, %c0_i32_11 : i32
    %27 = arith.extui %26 : i1 to i32
    %c0_i32_12 = arith.constant 0 : i32
    %28 = arith.cmpi ne, %27, %c0_i32_12 : i32
    scf.if %28 {
      %c0_13 = arith.constant 0 : index
      %c0_14 = arith.constant 0 : index
      %29 = vector.load %arg7[%c0_13, %c0_14] : memref<8x128xf32, #tpu.memory_space<vmem>>, vector<8x128xf32>
      %c0_15 = arith.constant 0 : index
      %c0_16 = arith.constant 0 : index
      %c0_17 = arith.constant 0 : index
      %30 = vector.load %arg6[%c0_15, %c0_16, %c0_17] : memref<1x8x128xf32, #tpu.memory_space<vmem>>, vector<1x8x128xf32>
      %31 = vector.shape_cast %30 : vector<1x8x128xf32> to vector<8x128xf32>
      %32 = vector.shape_cast %29 : vector<8x128xf32> to vector<1x8x128xf32>
      tpu.vector_store %arg6[%c0_15, %c0_16, %c0_17], %32 {strides = array<i32>} : memref<1x8x128xf32, #tpu.memory_space<vmem>>, vector<1x8x128xf32>,
    } else {
    }
    return
  }
  func.func @transform_0(%arg0: i32, %arg1: i32, %arg2: i32, %arg3: i32) -> (i32, i32, i32) {
    %c0_i32 = arith.constant 0 : i32
    return %arg0, %arg2, %arg3 : i32, i32, i32
  }
  func.func @transform_1(%arg0: i32, %arg1: i32, %arg2: i32, %arg3: i32) -> (i32, i32, i32) {
    %c0_i32 = arith.constant 0 : i32
    %c0_i32_0 = arith.constant 0 : i32
    return %arg0, %arg3, %c0_i32 : i32, i32, i32
  }
  func.func @transform_2(%arg0: i32, %arg1: i32, %arg2: i32, %arg3: i32) -> (i32, i32, i32) {
    %c0_i32 = arith.constant 0 : i32
    return %arg0, %arg2, %arg1 : i32, i32, i32
  }
}

</mosaic_0001>

<llo_original>
// kernel: tpu_custom_call.1
$region0: #{tpu_custom_call.1}
  #allocation0 [shape = 'u32[]', space=smem, size = 0x4, offset = 0x4, fixed_abs, tag = 'smem constant byte address 0x4 - core index']
  #allocation1 [shape = 'u32[144,128]{1,0:T(1,128)}', space=vmem, size = 0x12000, scoped, tag = 'internal scratch']
  #allocation2 [shape = 'f32[8,128]{1,0:T(8,128)}', space=vmem, size = 0x1000, scoped, tag = 'scratch operand']
  #allocation3 [shape = 'f32[8,128]{1,0:T(8,128)}', space=vmem, size = 0x1000, scoped, tag = 'scratch operand']
  %s0 = inlined_call_operand.vmem [shape: f32[2,8,256], index: 0, kind: input, shape index: {}]
  %s1 = inlined_call_operand.vmem [shape: s32[2,256,1], index: 1, kind: input, shape index: {}]
  %s2 = inlined_call_operand.hbm [shape: f32[2,8,128], index: 2, kind: output, shape index: {}]
  %s3 = sld [smem:[#allocation0]]
  $region49: #{tpu_custom_call.1} parent=0
    _
  %s5 = ssub.s32 1, %s3
  %s6 = scalar_select 0, %s5, %s3
  $region1: #{tpu_custom_call.1} parent=0
    #allocation4 [shape = 'u8[8192]{0}', space=vmem, size = 0x2000, scoped, tag = 'output window, operand 0']
    #allocation5 [shape = 's32[2]{0}', space=sflag, size = 0x8, scoped, tag = 'scoped memory for tpu_custom_call.1']
    %7 = vsyncpa [#allocation5], 0
    %s8 = scalar_lea.sflag [#allocation5], 1
    %9 = vsyncpa %s8, 0
    loop: start=0, step=1, limit=4
    $region2: #{tpu_custom_call.1} parent=1 // loop_pre_header
      _
    $region3: #{tpu_custom_call.1} parent=1 // loop_header
      %s11 = sphi 0, %s15
      %p12 = scmp.ge.s32.totalorder %s11, 4
      %s18 = sphi 0, %s44
      %s19 = sphi 0, %s40
      %s20 = sphi 0, %s36
      %s21 = sphi 0, %s32
      %s22 = sphi 0, %s18
      %s23 = sphi 0, %s19
      %s24 = sphi 0, %s20
      %s25 = sphi 0, %s21
      %s26 = sphi 0, %s22
      %s27 = sphi 0, %s23
      %s28 = sphi 0, %s24
      %s29 = sphi 0, %s25
      %s51 = sphi 0, %s53
      %s54 = sphi 0, %s51
      %s55 = sphi 0, %s54
      %s71 = sphi 0, %s55
      %s79 = sphi 0, %s81
      %s82 = sphi 0, %s79
      %s83 = sphi 0, %s82
      %s99 = sphi 0, %s83
      %s109 = sphi 0, %s111
      %s112 = sphi 0, %s109
      %s113 = sphi 0, %s112
      %s129 = sphi 0, %s113
    $region4: #{tpu_custom_call.1} parent=1 // loop_header_branch
      %14 = sbr.rel (%p12) target = $region8
    $region5: #{tpu_custom_call.1} parent=1 // loop_body
      %s16 = ssub.s32 %s11, 1
      %s17 = ssub.s32 %s11, 2
      %s30 = sadd.s32 1, %s21
      %p31 = scmp.ge.s32.totalorder %s30, 1
      %s32 = scalar_select %p31, 0, %s30
      %s33 = sadd.s32 1, %s20
      %s34 = scalar_select %p31, %s33, %s20
      %p35 = scmp.ge.s32.totalorder %s34, 1
      %s36 = scalar_select %p35, 0, %s34
      %s37 = sadd.s32 1, %s19
      %s38 = scalar_select %p35, %s37, %s19
      %p39 = scmp.ge.s32.totalorder %s38, 1
      %s40 = scalar_select %p39, 0, %s38
      %s41 = sadd.s32 1, %s18
      %s42 = scalar_select %p39, %s41, %s18
      %p43 = scmp.ge.s32.totalorder %s42, 2
      %s44 = scalar_select %p43, 0, %s42
      %s45 = ssub.s32 %s18, %s44
      %s46 = ssub.s32 %s20, %s36
      %s47 = sor.u32 %s45, %s46
      %s48 = ssub.s32 %s21, %s32
      %s49 = sor.u32 %s47, %s48
      %p50 = scmp.eq.s32.totalorder %s49, 0
      %s52 = sadd.s32 %s51, 1
      %s53 = scalar_select %p50, %s51, %s52
      %p56 = pneg %p50
      %p57 = scmp.eq.s32.totalorder %s11, 1
      %p58 = por %p56, %p57
      %p59 = scmp.ne.s32.totalorder %s51, %s54
      %p60 = scmp.eq.s32.totalorder %s11, 0
      %p61 = por %p59, %p60
      %p62 = scmp.ne.s32.totalorder %s51, %s54
      %p63 = scmp.eq.s32.totalorder %s16, 1
      %p64 = por %p62, %p63
      %p65 = scmp.ne.s32.totalorder %s54, %s55
      %p66 = scmp.eq.s32.totalorder %s16, 0
      %p67 = por %p65, %p66
      %p68 = scmp.ne.s32.totalorder %s54, %s55
      %p69 = scmp.eq.s32.totalorder %s17, 1
      %p70 = por %p68, %p69
      %p72 = scmp.ne.s32.totalorder %s55, %s71
      %p73 = scmp.eq.s32.totalorder %s17, 0
      %p74 = por %p72, %p73
      %s75 = ssub.s32 %s18, %s44
      %s76 = ssub.s32 %s21, %s32
      %s77 = sor.u32 %s75, %s76
      %p78 = scmp.eq.s32.totalorder %s77, 0
      %s80 = sadd.s32 %s79, 1
      %s81 = scalar_select %p78, %s79, %s80
      %p84 = pneg %p78
      %p85 = scmp.eq.s32.totalorder %s11, 1
      %p86 = por %p84, %p85
      %p87 = scmp.ne.s32.totalorder %s79, %s82
      %p88 = scmp.eq.s32.totalorder %s11, 0
      %p89 = por %p87, %p88
      %p90 = scmp.ne.s32.totalorder %s79, %s82
      %p91 = scmp.eq.s32.totalorder %s16, 1
      %p92 = por %p90, %p91
      %p93 = scmp.ne.s32.totalorder %s82, %s83
      %p94 = scmp.eq.s32.totalorder %s16, 0
      %p95 = por %p93, %p94
      %p96 = scmp.ne.s32.totalorder %s82, %s83
      %p97 = scmp.eq.s32.totalorder %s17, 1
      %p98 = por %p96, %p97
      %p100 = scmp.ne.s32.totalorder %s83, %s99
      %p101 = scmp.eq.s32.totalorder %s17, 0
      %p102 = por %p100, %p101
      %s103 = ssub.s32 %s18, %s44
      %s104 = ssub.s32 %s20, %s36
      %s105 = sor.u32 %s103, %s104
      %s106 = ssub.s32 %s19, %s40
      %s107 = sor.u32 %s105, %s106
      %p108 = scmp.eq.s32.totalorder %s107, 0
      %s110 = sadd.s32 %s109, 1
      %s111 = scalar_select %p108, %s109, %s110
      %p114 = pneg %p108
      %p115 = scmp.eq.s32.totalorder %s11, 1
      %p116 = por %p114, %p115
      %p117 = scmp.ne.s32.totalorder %s109, %s112
      %p118 = scmp.eq.s32.totalorder %s11, 0
      %p119 = por %p117, %p118
      %p120 = scmp.ne.s32.totalorder %s109, %s112
      %p121 = scmp.eq.s32.totalorder %s16, 1
      %p122 = por %p120, %p121
      %p123 = scmp.ne.s32.totalorder %s112, %s113
      %p124 = scmp.eq.s32.totalorder %s16, 0
      %p125 = por %p123, %p124
      %p126 = scmp.ne.s32.totalorder %s112, %s113
      %p127 = scmp.eq.s32.totalorder %s17, 1
      %p128 = por %p126, %p127
      %p130 = scmp.ne.s32.totalorder %s113, %s129
      %p131 = scmp.eq.s32.totalorder %s17, 0
      %p132 = por %p130, %p131
      %p133 = scmp.le.s32.totalorder 1, %s11
      %p134 = scmp.lt.s32.totalorder %s11, 3
      %p135 = pnand %p133, %p134
      %p136 = pneg %p135
      // Predicated region
      $region9: #{tpu_custom_call.1} parent=5 // pred_check
        _
      $region10: #{tpu_custom_call.1} parent=5 // pred_check_branch
        %138 = sbr.rel (%p135) target = $region12
      $region11: #{tpu_custom_call.1} parent=5 // pred_region
        %s139 = ssub.s32 %s11, 1
      $region12: #{tpu_custom_call.1} parent=5 // pred_fallthru
        _
      %p140 = scmp.lt.s32.totalorder %s11, 2
      // Predicated region
      $region13: #{tpu_custom_call.1} parent=5 // pred_check
        %p141 = pneg %p140
      $region14: #{tpu_custom_call.1} parent=5 // pred_check_branch
        %143 = sbr.rel (%p141) target = $region16
      $region15: #{tpu_custom_call.1} parent=5 // pred_region
        // Predicated region
        $region17: #{tpu_custom_call.1} parent=15 // pred_check
          %p144 = pneg %p61
        $region18: #{tpu_custom_call.1} parent=15 // pred_check_branch
          %146 = sbr.rel (%p144) target = $region20
        $region19: #{tpu_custom_call.1} parent=15 // pred_region
          %s147 = smul.u32 2, %s21
          %p148 = scmp.lt.s32.totalorder %s18, 1
          %s149 = scalar_select %p148, %s18, 1
          %p150 = scmp.lt.s32.totalorder %s20, 0
          %s151 = scalar_select %p150, %s20, 0
          %p152 = scmp.lt.s32.totalorder %s147, 1
          %s153 = scalar_select %p152, %s147, 1
          %s154 = smul.addr %s151, 2
          %s155 = sadd.s32 %s153, %s154
          %s156 = smul.addr %s149, 2
          %s157 = sadd.s32 %s155, %s156
          %s158 = smul.addr %s157, 8
          %s159 = scalar_lea.vmem %s0, %s158
          %s160 = smul.u32 2, %s21
        $region20: #{tpu_custom_call.1} parent=15 // pred_fallthru
          _
        // Predicated region
        $region21: #{tpu_custom_call.1} parent=15 // pred_check
          %p161 = pneg %p89
        $region22: #{tpu_custom_call.1} parent=15 // pred_check_branch
          %163 = sbr.rel (%p161) target = $region24
        $region23: #{tpu_custom_call.1} parent=15 // pred_region
          %s164 = smul.u32 32, %s21
          %p165 = scmp.lt.s32.totalorder %s18, 1
          %s166 = scalar_select %p165, %s18, 1
          %p167 = scmp.lt.s32.totalorder %s164, 31
          %s168 = scalar_select %p167, %s164, 31
          %s169 = smul.addr %s166, 32
          %s170 = sadd.s32 %s168, %s169
          %s171 = smul.addr %s170, 8
          %s172 = scalar_lea.vmem %s1, %s171
          %s173 = smul.u32 32, %s21
        $region24: #{tpu_custom_call.1} parent=15 // pred_fallthru
          _
      $region16: #{tpu_custom_call.1} parent=5 // pred_fallthru
        _
      %p174 = scmp.le.s32.totalorder 1, %s11
      %p175 = scmp.lt.s32.totalorder %s11, 3
      %p176 = pnand %p174, %p175
      %p177 = pneg %p176
      // Predicated region
      $region25: #{tpu_custom_call.1} parent=5 // pred_check
        _
      $region26: #{tpu_custom_call.1} parent=5 // pred_check_branch
        %179 = sbr.rel (%p176) target = $region28
      $region27: #{tpu_custom_call.1} parent=5 // pred_region
        %s180 = ssub.s32 %s11, 1
        %s181 = smul.u32 2, %s25
        %p182 = scmp.lt.s32.totalorder %s22, 1
        %s183 = scalar_select %p182, %s22, 1
        %p184 = scmp.lt.s32.totalorder %s24, 0
        %s185 = scalar_select %p184, %s24, 0
        %p186 = scmp.lt.s32.totalorder %s181, 1
        %s187 = scalar_select %p186, %s181, 1
        %s188 = smul.addr %s185, 2
        %s189 = sadd.s32 %s187, %s188
        %s190 = smul.addr %s183, 2
        %s191 = sadd.s32 %s189, %s190
        %s192 = smul.addr %s191, 8
        %s193 = scalar_lea.vmem %s0, %s192
        %p194 = pneg %p67
        %p195 = pneg %p64
        %s196 = smul.u32 32, %s25
        %p197 = scmp.lt.s32.totalorder %s22, 1
        %s198 = scalar_select %p197, %s22, 1
        %p199 = scmp.lt.s32.totalorder %s196, 31
        %s200 = scalar_select %p199, %s196, 31
        %s201 = smul.addr %s198, 32
        %s202 = sadd.s32 %s200, %s201
        %s203 = smul.addr %s202, 8
        %s204 = scalar_lea.vmem %s1, %s203
        %p205 = pneg %p95
        %p206 = pneg %p92
        %p207 = pneg %p125
        %p208 = pneg %p122
        %s209 = sand.u32 %s112, 1
        %s210 = scalar_lea.sflag [#allocation5], %s209
        %s211 = sand.u32 %s112, 1
        %s212 = smul.addr %s211, 8
        %s213 = scalar_lea.vmem [#allocation4], %s212
        %s214 = smul.u32 2, %s25
        %p215 = scmp.lt.s32.totalorder %s22, 1
        %s216 = scalar_select %p215, %s22, 1
        %p217 = scmp.lt.s32.totalorder %s24, 0
        %s218 = scalar_select %p217, %s24, 0
        %p219 = scmp.lt.s32.totalorder %s214, 1
        %s220 = scalar_select %p219, %s214, 1
        %s221 = smul.addr %s218, 2
        %s222 = sadd.s32 %s220, %s221
        %s223 = smul.addr %s216, 2
        %s224 = sadd.s32 %s222, %s223
        %s225 = smul.addr %s224, 8
        %s226 = scalar_lea.vmem %s0, %s225
        %s227 = smul.u32 2, %s25
        %s228 = smul.u32 32, %s25
        %p229 = scmp.lt.s32.totalorder %s22, 1
        %s230 = scalar_select %p229, %s22, 1
        %p231 = scmp.lt.s32.totalorder %s228, 31
        %s232 = scalar_select %p231, %s228, 31
        %s233 = smul.addr %s230, 32
        %s234 = sadd.s32 %s232, %s233
        %s235 = smul.addr %s234, 8
        %s236 = scalar_lea.vmem %s1, %s235
        %s237 = smul.u32 32, %s25
        %p238 = scmp.eq.s32.totalorder %s25, 0
        // Predicated region
        $region29: #{tpu_custom_call.1} parent=27 // pred_check
          %p239 = pneg %p238
        $region30: #{tpu_custom_call.1} parent=27 // pred_check_branch
          %241 = sbr.rel (%p239) target = $region32
        $region31: #{tpu_custom_call.1} parent=27 // pred_region
          %242 = vst [vmem:[#allocation2] sm:$0xff] 0.0
        $region32: #{tpu_custom_call.1} parent=27 // pred_fallthru
          _
        %v243 = vld [vmem:[%s226] sm:$0xff]
        %v244 = vld [vmem:[%s226 + $0x8] sm:$0xff]
        %v245 = vld [vmem:[%s236] sm:$0xff]
        %v246 = vld [vmem:[%s236 + $0x8] sm:$0xff]
        %v247 = vld [vmem:[%s236 + $0x10] sm:$0xff]
        %v248 = vld [vmem:[%s236 + $0x18] sm:$0xff]
        %v249 = vld [vmem:[%s236 + $0x20] sm:$0xff]
        %v250 = vld [vmem:[%s236 + $0x28] sm:$0xff]
        %v251 = vld [vmem:[%s236 + $0x30] sm:$0xff]
        %v252 = vld [vmem:[%s236 + $0x38] sm:$0xff]
        %v253 = vld [vmem:[%s236 + $0x40] sm:$0xff]
        %v254 = vld [vmem:[%s236 + $0x48] sm:$0xff]
        %v255 = vld [vmem:[%s236 + $0x50] sm:$0xff]
        %v256 = vld [vmem:[%s236 + $0x58] sm:$0xff]
        %v257 = vld [vmem:[%s236 + $0x60] sm:$0xff]
        %v258 = vld [vmem:[%s236 + $0x68] sm:$0xff]
        %v259 = vld [vmem:[%s236 + $0x70] sm:$0xff]
        %v260 = vld [vmem:[%s236 + $0x78] sm:$0xff]
        %v261 = vld [vmem:[%s236 + $0x80] sm:$0xff]
        %v262 = vld [vmem:[%s236 + $0x88] sm:$0xff]
        %v263 = vld [vmem:[%s236 + $0x90] sm:$0xff]
        %v264 = vld [vmem:[%s236 + $0x98] sm:$0xff]
        %v265 = vld [vmem:[%s236 + $0xa0] sm:$0xff]
        %v266 = vld [vmem:[%s236 + $0xa8] sm:$0xff]
        %v267 = vld [vmem:[%s236 + $0xb0] sm:$0xff]
        %v268 = vld [vmem:[%s236 + $0xb8] sm:$0xff]
        %v269 = vld [vmem:[%s236 + $0xc0] sm:$0xff]
        %v270 = vld [vmem:[%s236 + $0xc8] sm:$0xff]
        %v271 = vld [vmem:[%s236 + $0xd0] sm:$0xff]
        %v272 = vld [vmem:[%s236 + $0xd8] sm:$0xff]
        %v273 = vld [vmem:[%s236 + $0xe0] sm:$0xff]
        %v274 = vld [vmem:[%s236 + $0xe8] sm:$0xff]
        %v275 = vld [vmem:[%s236 + $0xf0] sm:$0xff]
        %v276 = vld [vmem:[%s236 + $0xf8] sm:$0xff]
        %v277 = vlaneseq
        %v278 = vand.u32 %v277, 127
        %s279 = smul.u32 %s23, 128
        %s280 = sadd.s32 %s279, 1
        %v281 = vstv %s280
        %v282 = vadd.s32 %v278, %v281
        %283 = vset.pattern.permute.xlu0 0
        %284 = vperm.xlu0 %283, %v245
        %v285 = vpop.permute.xlu0 %284
        %286 = vset.pattern.permute.xlu0 0
        %287 = vperm.xlu0 %286, %v246
        %v288 = vpop.permute.xlu0 %287
        %289 = vset.pattern.permute.xlu0 0
        %290 = vperm.xlu0 %289, %v247
        %v291 = vpop.permute.xlu0 %290
        %292 = vset.pattern.permute.xlu0 0
        %293 = vperm.xlu0 %292, %v248
        %v294 = vpop.permute.xlu0 %293
        %295 = vset.pattern.permute.xlu0 0
        %296 = vperm.xlu0 %295, %v249
        %v297 = vpop.permute.xlu0 %296
        %298 = vset.pattern.permute.xlu0 0
        %299 = vperm.xlu0 %298, %v250
        %v300 = vpop.permute.xlu0 %299
        %301 = vset.pattern.permute.xlu0 0
        %302 = vperm.xlu0 %301, %v251
        %v303 = vpop.permute.xlu0 %302
        %304 = vset.pattern.permute.xlu0 0
        %305 = vperm.xlu0 %304, %v252
        %v306 = vpop.permute.xlu0 %305
        %307 = vset.pattern.permute.xlu0 0
        %308 = vperm.xlu0 %307, %v253
        %v309 = vpop.permute.xlu0 %308
        %310 = vset.pattern.permute.xlu0 0
        %311 = vperm.xlu0 %310, %v254
        %v312 = vpop.permute.xlu0 %311
        %313 = vset.pattern.permute.xlu0 0
        %314 = vperm.xlu0 %313, %v255
        %v315 = vpop.permute.xlu0 %314
        %316 = vset.pattern.permute.xlu0 0
        %317 = vperm.xlu0 %316, %v256
        %v318 = vpop.permute.xlu0 %317
        %319 = vset.pattern.permute.xlu0 0
        %320 = vperm.xlu0 %319, %v257
        %v321 = vpop.permute.xlu0 %320
        %322 = vset.pattern.permute.xlu0 0
        %323 = vperm.xlu0 %322, %v258
        %v324 = vpop.permute.xlu0 %323
        %325 = vset.pattern.permute.xlu0 0
        %326 = vperm.xlu0 %325, %v259
        %v327 = vpop.permute.xlu0 %326
        %328 = vset.pattern.permute.xlu0 0
        %329 = vperm.xlu0 %328, %v260
        %v330 = vpop.permute.xlu0 %329
        %331 = vset.pattern.permute.xlu0 0
        %332 = vperm.xlu0 %331, %v261
        %v333 = vpop.permute.xlu0 %332
        %334 = vset.pattern.permute.xlu0 0
        %335 = vperm.xlu0 %334, %v262
        %v336 = vpop.permute.xlu0 %335
        %337 = vset.pattern.permute.xlu0 0
        %338 = vperm.xlu0 %337, %v263
        %v339 = vpop.permute.xlu0 %338
        %340 = vset.pattern.permute.xlu0 0
        %341 = vperm.xlu0 %340, %v264
        %v342 = vpop.permute.xlu0 %341
        %343 = vset.pattern.permute.xlu0 0
        %344 = vperm.xlu0 %343, %v265
        %v345 = vpop.permute.xlu0 %344
        %346 = vset.pattern.permute.xlu0 0
        %347 = vperm.xlu0 %346, %v266
        %v348 = vpop.permute.xlu0 %347
        %349 = vset.pattern.permute.xlu0 0
        %350 = vperm.xlu0 %349, %v267
        %v351 = vpop.permute.xlu0 %350
        %352 = vset.pattern.permute.xlu0 0
        %353 = vperm.xlu0 %352, %v268
        %v354 = vpop.permute.xlu0 %353
        %355 = vset.pattern.permute.xlu0 0
        %356 = vperm.xlu0 %355, %v269
        %v357 = vpop.permute.xlu0 %356
        %358 = vset.pattern.permute.xlu0 0
        %359 = vperm.xlu0 %358, %v270
        %v360 = vpop.permute.xlu0 %359
        %361 = vset.pattern.permute.xlu0 0
        %362 = vperm.xlu0 %361, %v271
        %v363 = vpop.permute.xlu0 %362
        %364 = vset.pattern.permute.xlu0 0
        %365 = vperm.xlu0 %364, %v272
        %v366 = vpop.permute.xlu0 %365
        %367 = vset.pattern.permute.xlu0 0
        %368 = vperm.xlu0 %367, %v273
        %v369 = vpop.permute.xlu0 %368
        %370 = vset.pattern.permute.xlu0 0
        %371 = vperm.xlu0 %370, %v274
        %v372 = vpop.permute.xlu0 %371
        %373 = vset.pattern.permute.xlu0 0
        %374 = vperm.xlu0 %373, %v275
        %v375 = vpop.permute.xlu0 %374
        %376 = vset.pattern.permute.xlu0 0
        %377 = vperm.xlu0 %376, %v276
        %v378 = vpop.permute.xlu0 %377
        %vm379 = vcmp.eq.s32.totalorder %v285, %v282
        %vm380 = vcmp.eq.s32.totalorder %v288, %v282
        %vm381 = vcmp.eq.s32.totalorder %v291, %v282
        %vm382 = vcmp.eq.s32.totalorder %v294, %v282
        %vm383 = vcmp.eq.s32.totalorder %v297, %v282
        %vm384 = vcmp.eq.s32.totalorder %v300, %v282
        %vm385 = vcmp.eq.s32.totalorder %v303, %v282
        %vm386 = vcmp.eq.s32.totalorder %v306, %v282
        %vm387 = vcmp.eq.s32.totalorder %v309, %v282
        %vm388 = vcmp.eq.s32.totalorder %v312, %v282
        %vm389 = vcmp.eq.s32.totalorder %v315, %v282
        %vm390 = vcmp.eq.s32.totalorder %v318, %v282
        %vm391 = vcmp.eq.s32.totalorder %v321, %v282
        %vm392 = vcmp.eq.s32.totalorder %v324, %v282
        %vm393 = vcmp.eq.s32.totalorder %v327, %v282
        %vm394 = vcmp.eq.s32.totalorder %v330, %v282
        %vm395 = vcmp.eq.s32.totalorder %v333, %v282
        %vm396 = vcmp.eq.s32.totalorder %v336, %v282
        %vm397 = vcmp.eq.s32.totalorder %v339, %v282
        %vm398 = vcmp.eq.s32.totalorder %v342, %v282
        %vm399 = vcmp.eq.s32.totalorder %v345, %v282
        %vm400 = vcmp.eq.s32.totalorder %v348, %v282
        %vm401 = vcmp.eq.s32.totalorder %v351, %v282
        %vm402 = vcmp.eq.s32.totalorder %v354, %v282
        %vm403 = vcmp.eq.s32.totalorder %v357, %v282
        %vm404 = vcmp.eq.s32.totalorder %v360, %v282
        %vm405 = vcmp.eq.s32.totalorder %v363, %v282
        %vm406 = vcmp.eq.s32.totalorder %v366, %v282
        %vm407 = vcmp.eq.s32.totalorder %v369, %v282
        %vm408 = vcmp.eq.s32.totalorder %v372, %v282
        %vm409 = vcmp.eq.s32.totalorder %v375, %v282
        %vm410 = vcmp.eq.s32.totalorder %v378, %v282
        %v411 = vlaneseq
        %v412 = vshrl.u32 %v411, 7
        %v413 = vsub.s32 0, %v412
        %v414 = vrot.slane %v243, %v413
        %416 = vbcast.lane.b32.xlu0 %v414, 256
        %v417 = vpop.permute.xlu0 %416
        %s419 = sor.u32 256, 8
        %420 = vbcast.lane.b32.xlu0 %v414, %s419
        %v421 = vpop.permute.xlu0 %420
        %s423 = sor.u32 256, 16
        %424 = vbcast.lane.b32.xlu0 %v414, %s423
        %v425 = vpop.permute.xlu0 %424
        %s427 = sor.u32 256, 24
        %428 = vbcast.lane.b32.xlu0 %v414, %s427
        %v429 = vpop.permute.xlu0 %428
        %s431 = sor.u32 256, 32
        %432 = vbcast.lane.b32.xlu0 %v414, %s431
        %v433 = vpop.permute.xlu0 %432
        %s435 = sor.u32 256, 40
        %436 = vbcast.lane.b32.xlu0 %v414, %s435
        %v437 = vpop.permute.xlu0 %436
        %s439 = sor.u32 256, 48
        %440 = vbcast.lane.b32.xlu0 %v414, %s439
        %v441 = vpop.permute.xlu0 %440
        %s443 = sor.u32 256, 56
        %444 = vbcast.lane.b32.xlu0 %v414, %s443
        %v445 = vpop.permute.xlu0 %444
        %s447 = sor.u32 256, 64
        %448 = vbcast.lane.b32.xlu0 %v414, %s447
        %v449 = vpop.permute.xlu0 %448
        %s451 = sor.u32 256, 72
        %452 = vbcast.lane.b32.xlu0 %v414, %s451
        %v453 = vpop.permute.xlu0 %452
        %s455 = sor.u32 256, 80
        %456 = vbcast.lane.b32.xlu0 %v414, %s455
        %v457 = vpop.permute.xlu0 %456
        %s459 = sor.u32 256, 88
        %460 = vbcast.lane.b32.xlu0 %v414, %s459
        %v461 = vpop.permute.xlu0 %460
        %s463 = sor.u32 256, 96
        %464 = vbcast.lane.b32.xlu0 %v414, %s463
        %v465 = vpop.permute.xlu0 %464
        %s467 = sor.u32 256, 104
        %468 = vbcast.lane.b32.xlu0 %v414, %s467
        %v469 = vpop.permute.xlu0 %468
        %s471 = sor.u32 256, 112
        %472 = vbcast.lane.b32.xlu0 %v414, %s471
        %v473 = vpop.permute.xlu0 %472
        %s475 = sor.u32 256, 120
        %476 = vbcast.lane.b32.xlu0 %v414, %s475
        %v477 = vpop.permute.xlu0 %476
        %v478 = vlaneseq
        %v479 = vshrl.u32 %v478, 7
        %v480 = vsub.s32 0, %v479
        %v481 = vrot.slane %v244, %v480
        %483 = vbcast.lane.b32.xlu0 %v481, 256
        %v484 = vpop.permute.xlu0 %483
        %s486 = sor.u32 256, 8
        %487 = vbcast.lane.b32.xlu0 %v481, %s486
        %v488 = vpop.permute.xlu0 %487
        %s490 = sor.u32 256, 16
        %491 = vbcast.lane.b32.xlu0 %v481, %s490
        %v492 = vpop.permute.xlu0 %491
        %s494 = sor.u32 256, 24
        %495 = vbcast.lane.b32.xlu0 %v481, %s494
        %v496 = vpop.permute.xlu0 %495
        %s498 = sor.u32 256, 32
        %499 = vbcast.lane.b32.xlu0 %v481, %s498
        %v500 = vpop.permute.xlu0 %499
        %s502 = sor.u32 256, 40
        %503 = vbcast.lane.b32.xlu0 %v481, %s502
        %v504 = vpop.permute.xlu0 %503
        %s506 = sor.u32 256, 48
        %507 = vbcast.lane.b32.xlu0 %v481, %s506
        %v508 = vpop.permute.xlu0 %507
        %s510 = sor.u32 256, 56
        %511 = vbcast.lane.b32.xlu0 %v481, %s510
        %v512 = vpop.permute.xlu0 %511
        %s514 = sor.u32 256, 64
        %515 = vbcast.lane.b32.xlu0 %v481, %s514
        %v516 = vpop.permute.xlu0 %515
        %s518 = sor.u32 256, 72
        %519 = vbcast.lane.b32.xlu0 %v481, %s518
        %v520 = vpop.permute.xlu0 %519
        %s522 = sor.u32 256, 80
        %523 = vbcast.lane.b32.xlu0 %v481, %s522
        %v524 = vpop.permute.xlu0 %523
        %s526 = sor.u32 256, 88
        %527 = vbcast.lane.b32.xlu0 %v481, %s526
        %v528 = vpop.permute.xlu0 %527
        %s530 = sor.u32 256, 96
        %531 = vbcast.lane.b32.xlu0 %v481, %s530
        %v532 = vpop.permute.xlu0 %531
        %s534 = sor.u32 256, 104
        %535 = vbcast.lane.b32.xlu0 %v481, %s534
        %v536 = vpop.permute.xlu0 %535
        %s538 = sor.u32 256, 112
        %539 = vbcast.lane.b32.xlu0 %v481, %s538
        %v540 = vpop.permute.xlu0 %539
        %s542 = sor.u32 256, 120
        %543 = vbcast.lane.b32.xlu0 %v481, %s542
        %v544 = vpop.permute.xlu0 %543
        %v545 = vlaneseq
        %v546 = vshrl.u32 %v545, 7
        %v547 = vsub.s32 1, %v546
        %v548 = vrot.slane %v243, %v547
        %550 = vbcast.lane.b32.xlu0 %v548, 256
        %v551 = vpop.permute.xlu0 %550
        %s553 = sor.u32 256, 8
        %554 = vbcast.lane.b32.xlu0 %v548, %s553
        %v555 = vpop.permute.xlu0 %554
        %s557 = sor.u32 256, 16
        %558 = vbcast.lane.b32.xlu0 %v548, %s557
        %v559 = vpop.permute.xlu0 %558
        %s561 = sor.u32 256, 24
        %562 = vbcast.lane.b32.xlu0 %v548, %s561
        %v563 = vpop.permute.xlu0 %562
        %s565 = sor.u32 256, 32
        %566 = vbcast.lane.b32.xlu0 %v548, %s565
        %v567 = vpop.permute.xlu0 %566
        %s569 = sor.u32 256, 40
        %570 = vbcast.lane.b32.xlu0 %v548, %s569
        %v571 = vpop.permute.xlu0 %570
        %s573 = sor.u32 256, 48
        %574 = vbcast.lane.b32.xlu0 %v548, %s573
        %v575 = vpop.permute.xlu0 %574
        %s577 = sor.u32 256, 56
        %578 = vbcast.lane.b32.xlu0 %v548, %s577
        %v579 = vpop.permute.xlu0 %578
        %s581 = sor.u32 256, 64
        %582 = vbcast.lane.b32.xlu0 %v548, %s581
        %v583 = vpop.permute.xlu0 %582
        %s585 = sor.u32 256, 72
        %586 = vbcast.lane.b32.xlu0 %v548, %s585
        %v587 = vpop.permute.xlu0 %586
        %s589 = sor.u32 256, 80
        %590 = vbcast.lane.b32.xlu0 %v548, %s589
        %v591 = vpop.permute.xlu0 %590
        %s593 = sor.u32 256, 88
        %594 = vbcast.lane.b32.xlu0 %v548, %s593
        %v595 = vpop.permute.xlu0 %594
        %s597 = sor.u32 256, 96
        %598 = vbcast.lane.b32.xlu0 %v548, %s597
        %v599 = vpop.permute.xlu0 %598
        %s601 = sor.u32 256, 104
        %602 = vbcast.lane.b32.xlu0 %v548, %s601
        %v603 = vpop.permute.xlu0 %602
        %s605 = sor.u32 256, 112
        %606 = vbcast.lane.b32.xlu0 %v548, %s605
        %v607 = vpop.permute.xlu0 %606
        %s609 = sor.u32 256, 120
        %610 = vbcast.lane.b32.xlu0 %v548, %s609
        %v611 = vpop.permute.xlu0 %610
        %v612 = vlaneseq
        %v613 = vshrl.u32 %v612, 7
        %v614 = vsub.s32 1, %v613
        %v615 = vrot.slane %v244, %v614
        %617 = vbcast.lane.b32.xlu0 %v615, 256
        %v618 = vpop.permute.xlu0 %617
        %s620 = sor.u32 256, 8
        %621 = vbcast.lane.b32.xlu0 %v615, %s620
        %v622 = vpop.permute.xlu0 %621
        %s624 = sor.u32 256, 16
        %625 = vbcast.lane.b32.xlu0 %v615, %s624
        %v626 = vpop.permute.xlu0 %625
        %s628 = sor.u32 256, 24
        %629 = vbcast.lane.b32.xlu0 %v615, %s628
        %v630 = vpop.permute.xlu0 %629
        %s632 = sor.u32 256, 32
        %633 = vbcast.lane.b32.xlu0 %v615, %s632
        %v634 = vpop.permute.xlu0 %633
        %s636 = sor.u32 256, 40
        %637 = vbcast.lane.b32.xlu0 %v615, %s636
        %v638 = vpop.permute.xlu0 %637
        %s640 = sor.u32 256, 48
        %641 = vbcast.lane.b32.xlu0 %v615, %s640
        %v642 = vpop.permute.xlu0 %641
        %s644 = sor.u32 256, 56
        %645 = vbcast.lane.b32.xlu0 %v615, %s644
        %v646 = vpop.permute.xlu0 %645
        %s648 = sor.u32 256, 64
        %649 = vbcast.lane.b32.xlu0 %v615, %s648
        %v650 = vpop.permute.xlu0 %649
        %s652 = sor.u32 256, 72
        %653 = vbcast.lane.b32.xlu0 %v615, %s652
        %v654 = vpop.permute.xlu0 %653
        %s656 = sor.u32 256, 80
        %657 = vbcast.lane.b32.xlu0 %v615, %s656
        %v658 = vpop.permute.xlu0 %657
        %s660 = sor.u32 256, 88
        %661 = vbcast.lane.b32.xlu0 %v615, %s660
        %v662 = vpop.permute.xlu0 %661
        %s664 = sor.u32 256, 96
        %665 = vbcast.lane.b32.xlu0 %v615, %s664
        %v666 = vpop.permute.xlu0 %665
        %s668 = sor.u32 256, 104
        %669 = vbcast.lane.b32.xlu0 %v615, %s668
        %v670 = vpop.permute.xlu0 %669
        %s672 = sor.u32 256, 112
        %673 = vbcast.lane.b32.xlu0 %v615, %s672
        %v674 = vpop.permute.xlu0 %673
        %s676 = sor.u32 256, 120
        %677 = vbcast.lane.b32.xlu0 %v615, %s676
        %v678 = vpop.permute.xlu0 %677
        %v679 = vlaneseq
        %v680 = vshrl.u32 %v679, 7
        %v681 = vsub.s32 2, %v680
        %v682 = vrot.slane %v243, %v681
        %684 = vbcast.lane.b32.xlu0 %v682, 256
        %v685 = vpop.permute.xlu0 %684
        %s687 = sor.u32 256, 8
        %688 = vbcast.lane.b32.xlu0 %v682, %s687
        %v689 = vpop.permute.xlu0 %688
        %s691 = sor.u32 256, 16
        %692 = vbcast.lane.b32.xlu0 %v682, %s691
        %v693 = vpop.permute.xlu0 %692
        %s695 = sor.u32 256, 24
        %696 = vbcast.lane.b32.xlu0 %v682, %s695
        %v697 = vpop.permute.xlu0 %696
        %s699 = sor.u32 256, 32
        %700 = vbcast.lane.b32.xlu0 %v682, %s699
        %v701 = vpop.permute.xlu0 %700
        %s703 = sor.u32 256, 40
        %704 = vbcast.lane.b32.xlu0 %v682, %s703
        %v705 = vpop.permute.xlu0 %704
        %s707 = sor.u32 256, 48
        %708 = vbcast.lane.b32.xlu0 %v682, %s707
        %v709 = vpop.permute.xlu0 %708
        %s711 = sor.u32 256, 56
        %712 = vbcast.lane.b32.xlu0 %v682, %s711
        %v713 = vpop.permute.xlu0 %712
        %s715 = sor.u32 256, 64
        %716 = vbcast.lane.b32.xlu0 %v682, %s715
        %v717 = vpop.permute.xlu0 %716
        %s719 = sor.u32 256, 72
        %720 = vbcast.lane.b32.xlu0 %v682, %s719
        %v721 = vpop.permute.xlu0 %720
        %s723 = sor.u32 256, 80
        %724 = vbcast.lane.b32.xlu0 %v682, %s723
        %v725 = vpop.permute.xlu0 %724
        %s727 = sor.u32 256, 88
        %728 = vbcast.lane.b32.xlu0 %v682, %s727
        %v729 = vpop.permute.xlu0 %728
        %s731 = sor.u32 256, 96
        %732 = vbcast.lane.b32.xlu0 %v682, %s731
        %v733 = vpop.permute.xlu0 %732
        %s735 = sor.u32 256, 104
        %736 = vbcast.lane.b32.xlu0 %v682, %s735
        %v737 = vpop.permute.xlu0 %736
        %s739 = sor.u32 256, 112
        %740 = vbcast.lane.b32.xlu0 %v682, %s739
        %v741 = vpop.permute.xlu0 %740
        %s743 = sor.u32 256, 120
        %744 = vbcast.lane.b32.xlu0 %v682, %s743
        %v745 = vpop.permute.xlu0 %744
        %v746 = vlaneseq
        %v747 = vshrl.u32 %v746, 7
        %v748 = vsub.s32 2, %v747
        %v749 = vrot.slane %v244, %v748
        %751 = vbcast.lane.b32.xlu0 %v749, 256
        %v752 = vpop.permute.xlu0 %751
        %s754 = sor.u32 256, 8
        %755 = vbcast.lane.b32.xlu0 %v749, %s754
        %v756 = vpop.permute.xlu0 %755
        %s758 = sor.u32 256, 16
        %759 = vbcast.lane.b32.xlu0 %v749, %s758
        %v760 = vpop.permute.xlu0 %759
        %s762 = sor.u32 256, 24
        %763 = vbcast.lane.b32.xlu0 %v749, %s762
        %v764 = vpop.permute.xlu0 %763
        %s766 = sor.u32 256, 32
        %767 = vbcast.lane.b32.xlu0 %v749, %s766
        %v768 = vpop.permute.xlu0 %767
        %s770 = sor.u32 256, 40
        %771 = vbcast.lane.b32.xlu0 %v749, %s770
        %v772 = vpop.permute.xlu0 %771
        %s774 = sor.u32 256, 48
        %775 = vbcast.lane.b32.xlu0 %v749, %s774
        %v776 = vpop.permute.xlu0 %775
        %s778 = sor.u32 256, 56
        %779 = vbcast.lane.b32.xlu0 %v749, %s778
        %v780 = vpop.permute.xlu0 %779
        %s782 = sor.u32 256, 64
        %783 = vbcast.lane.b32.xlu0 %v749, %s782
        %v784 = vpop.permute.xlu0 %783
        %s786 = sor.u32 256, 72
        %787 = vbcast.lane.b32.xlu0 %v749, %s786
        %v788 = vpop.permute.xlu0 %787
        %s790 = sor.u32 256, 80
        %791 = vbcast.lane.b32.xlu0 %v749, %s790
        %v792 = vpop.permute.xlu0 %791
        %s794 = sor.u32 256, 88
        %795 = vbcast.lane.b32.xlu0 %v749, %s794
        %v796 = vpop.permute.xlu0 %795
        %s798 = sor.u32 256, 96
        %799 = vbcast.lane.b32.xlu0 %v749, %s798
        %v800 = vpop.permute.xlu0 %799
        %s802 = sor.u32 256, 104
        %803 = vbcast.lane.b32.xlu0 %v749, %s802
        %v804 = vpop.permute.xlu0 %803
        %s806 = sor.u32 256, 112
        %807 = vbcast.lane.b32.xlu0 %v749, %s806
        %v808 = vpop.permute.xlu0 %807
        %s810 = sor.u32 256, 120
        %811 = vbcast.lane.b32.xlu0 %v749, %s810
        %v812 = vpop.permute.xlu0 %811
        %v813 = vlaneseq
        %v814 = vshrl.u32 %v813, 7
        %v815 = vsub.s32 3, %v814
        %v816 = vrot.slane %v243, %v815
        %818 = vbcast.lane.b32.xlu0 %v816, 256
        %v819 = vpop.permute.xlu0 %818
        %s821 = sor.u32 256, 8
        %822 = vbcast.lane.b32.xlu0 %v816, %s821
        %v823 = vpop.permute.xlu0 %822
        %s825 = sor.u32 256, 16
        %826 = vbcast.lane.b32.xlu0 %v816, %s825
        %v827 = vpop.permute.xlu0 %826
        %s829 = sor.u32 256, 24
        %830 = vbcast.lane.b32.xlu0 %v816, %s829
        %v831 = vpop.permute.xlu0 %830
        %s833 = sor.u32 256, 32
        %834 = vbcast.lane.b32.xlu0 %v816, %s833
        %v835 = vpop.permute.xlu0 %834
        %s837 = sor.u32 256, 40
        %838 = vbcast.lane.b32.xlu0 %v816, %s837
        %v839 = vpop.permute.xlu0 %838
        %s841 = sor.u32 256, 48
        %842 = vbcast.lane.b32.xlu0 %v816, %s841
        %v843 = vpop.permute.xlu0 %842
        %s845 = sor.u32 256, 56
        %846 = vbcast.lane.b32.xlu0 %v816, %s845
        %v847 = vpop.permute.xlu0 %846
        %s849 = sor.u32 256, 64
        %850 = vbcast.lane.b32.xlu0 %v816, %s849
        %v851 = vpop.permute.xlu0 %850
        %s853 = sor.u32 256, 72
        %854 = vbcast.lane.b32.xlu0 %v816, %s853
        %v855 = vpop.permute.xlu0 %854
        %s857 = sor.u32 256, 80
        %858 = vbcast.lane.b32.xlu0 %v816, %s857
        %v859 = vpop.permute.xlu0 %858
        %s861 = sor.u32 256, 88
        %862 = vbcast.lane.b32.xlu0 %v816, %s861
        %v863 = vpop.permute.xlu0 %862
        %s865 = sor.u32 256, 96
        %866 = vbcast.lane.b32.xlu0 %v816, %s865
        %v867 = vpop.permute.xlu0 %866
        %s869 = sor.u32 256, 104
        %870 = vbcast.lane.b32.xlu0 %v816, %s869
        %v871 = vpop.permute.xlu0 %870
        %s873 = sor.u32 256, 112
        %874 = vbcast.lane.b32.xlu0 %v816, %s873
        %v875 = vpop.permute.xlu0 %874
        %s877 = sor.u32 256, 120
        %878 = vbcast.lane.b32.xlu0 %v816, %s877
        %v879 = vpop.permute.xlu0 %878
        %v880 = vlaneseq
        %v881 = vshrl.u32 %v880, 7
        %v882 = vsub.s32 3, %v881
        %v883 = vrot.slane %v244, %v882
        %885 = vbcast.lane.b32.xlu0 %v883, 256
        %v886 = vpop.permute.xlu0 %885
        %s888 = sor.u32 256, 8
        %889 = vbcast.lane.b32.xlu0 %v883, %s888
        %v890 = vpop.permute.xlu0 %889
        %s892 = sor.u32 256, 16
        %893 = vbcast.lane.b32.xlu0 %v883, %s892
        %v894 = vpop.permute.xlu0 %893
        %s896 = sor.u32 256, 24
        %897 = vbcast.lane.b32.xlu0 %v883, %s896
        %v898 = vpop.permute.xlu0 %897
        %s900 = sor.u32 256, 32
        %901 = vbcast.lane.b32.xlu0 %v883, %s900
        %v902 = vpop.permute.xlu0 %901
        %s904 = sor.u32 256, 40
        %905 = vbcast.lane.b32.xlu0 %v883, %s904
        %v906 = vpop.permute.xlu0 %905
        %s908 = sor.u32 256, 48
        %909 = vbcast.lane.b32.xlu0 %v883, %s908
        %v910 = vpop.permute.xlu0 %909
        %s912 = sor.u32 256, 56
        %913 = vbcast.lane.b32.xlu0 %v883, %s912
        %v914 = vpop.permute.xlu0 %913
        %s916 = sor.u32 256, 64
        %917 = vbcast.lane.b32.xlu0 %v883, %s916
        %v918 = vpop.permute.xlu0 %917
        %s920 = sor.u32 256, 72
        %921 = vbcast.lane.b32.xlu0 %v883, %s920
        %v922 = vpop.permute.xlu0 %921
        %s924 = sor.u32 256, 80
        %925 = vbcast.lane.b32.xlu0 %v883, %s924
        %v926 = vpop.permute.xlu0 %925
        %s928 = sor.u32 256, 88
        %929 = vbcast.lane.b32.xlu0 %v883, %s928
        %v930 = vpop.permute.xlu0 %929
        %s932 = sor.u32 256, 96
        %933 = vbcast.lane.b32.xlu0 %v883, %s932
        %v934 = vpop.permute.xlu0 %933
        %s936 = sor.u32 256, 104
        %937 = vbcast.lane.b32.xlu0 %v883, %s936
        %v938 = vpop.permute.xlu0 %937
        %s940 = sor.u32 256, 112
        %941 = vbcast.lane.b32.xlu0 %v883, %s940
        %v942 = vpop.permute.xlu0 %941
        %s944 = sor.u32 256, 120
        %945 = vbcast.lane.b32.xlu0 %v883, %s944
        %v946 = vpop.permute.xlu0 %945
        %v947 = vlaneseq
        %v948 = vshrl.u32 %v947, 7
        %v949 = vsub.s32 4, %v948
        %v950 = vrot.slane %v243, %v949
        %952 = vbcast.lane.b32.xlu0 %v950, 256
        %v953 = vpop.permute.xlu0 %952
        %s955 = sor.u32 256, 8
        %956 = vbcast.lane.b32.xlu0 %v950, %s955
        %v957 = vpop.permute.xlu0 %956
        %s959 = sor.u32 256, 16
        %960 = vbcast.lane.b32.xlu0 %v950, %s959
        %v961 = vpop.permute.xlu0 %960
        %s963 = sor.u32 256, 24
        %964 = vbcast.lane.b32.xlu0 %v950, %s963
        %v965 = vpop.permute.xlu0 %964
        %s967 = sor.u32 256, 32
        %968 = vbcast.lane.b32.xlu0 %v950, %s967
        %v969 = vpop.permute.xlu0 %968
        %s971 = sor.u32 256, 40
        %972 = vbcast.lane.b32.xlu0 %v950, %s971
        %v973 = vpop.permute.xlu0 %972
        %s975 = sor.u32 256, 48
        %976 = vbcast.lane.b32.xlu0 %v950, %s975
        %v977 = vpop.permute.xlu0 %976
        %s979 = sor.u32 256, 56
        %980 = vbcast.lane.b32.xlu0 %v950, %s979
        %v981 = vpop.permute.xlu0 %980
        %s983 = sor.u32 256, 64
        %984 = vbcast.lane.b32.xlu0 %v950, %s983
        %v985 = vpop.permute.xlu0 %984
        %s987 = sor.u32 256, 72
        %988 = vbcast.lane.b32.xlu0 %v950, %s987
        %v989 = vpop.permute.xlu0 %988
        %s991 = sor.u32 256, 80
        %992 = vbcast.lane.b32.xlu0 %v950, %s991
        %v993 = vpop.permute.xlu0 %992
        %s995 = sor.u32 256, 88
        %996 = vbcast.lane.b32.xlu0 %v950, %s995
        %v997 = vpop.permute.xlu0 %996
        %s999 = sor.u32 256, 96
        %1000 = vbcast.lane.b32.xlu0 %v950, %s999
        %v1001 = vpop.permute.xlu0 %1000
        %s1003 = sor.u32 256, 104
        %1004 = vbcast.lane.b32.xlu0 %v950, %s1003
        %v1005 = vpop.permute.xlu0 %1004
        %s1007 = sor.u32 256, 112
        %1008 = vbcast.lane.b32.xlu0 %v950, %s1007
        %v1009 = vpop.permute.xlu0 %1008
        %s1011 = sor.u32 256, 120
        %1012 = vbcast.lane.b32.xlu0 %v950, %s1011
        %v1013 = vpop.permute.xlu0 %1012
        %v1014 = vlaneseq
        %v1015 = vshrl.u32 %v1014, 7
        %v1016 = vsub.s32 4, %v1015
        %v1017 = vrot.slane %v244, %v1016
        %1019 = vbcast.lane.b32.xlu0 %v1017, 256
        %v1020 = vpop.permute.xlu0 %1019
        %s1022 = sor.u32 256, 8
        %1023 = vbcast.lane.b32.xlu0 %v1017, %s1022
        %v1024 = vpop.permute.xlu0 %1023
        %s1026 = sor.u32 256, 16
        %1027 = vbcast.lane.b32.xlu0 %v1017, %s1026
        %v1028 = vpop.permute.xlu0 %1027
        %s1030 = sor.u32 256, 24
        %1031 = vbcast.lane.b32.xlu0 %v1017, %s1030
        %v1032 = vpop.permute.xlu0 %1031
        %s1034 = sor.u32 256, 32
        %1035 = vbcast.lane.b32.xlu0 %v1017, %s1034
        %v1036 = vpop.permute.xlu0 %1035
        %s1038 = sor.u32 256, 40
        %1039 = vbcast.lane.b32.xlu0 %v1017, %s1038
        %v1040 = vpop.permute.xlu0 %1039
        %s1042 = sor.u32 256, 48
        %1043 = vbcast.lane.b32.xlu0 %v1017, %s1042
        %v1044 = vpop.permute.xlu0 %1043
        %s1046 = sor.u32 256, 56
        %1047 = vbcast.lane.b32.xlu0 %v1017, %s1046
        %v1048 = vpop.permute.xlu0 %1047
        %s1050 = sor.u32 256, 64
        %1051 = vbcast.lane.b32.xlu0 %v1017, %s1050
        %v1052 = vpop.permute.xlu0 %1051
        %s1054 = sor.u32 256, 72
        %1055 = vbcast.lane.b32.xlu0 %v1017, %s1054
        %v1056 = vpop.permute.xlu0 %1055
        %s1058 = sor.u32 256, 80
        %1059 = vbcast.lane.b32.xlu0 %v1017, %s1058
        %v1060 = vpop.permute.xlu0 %1059
        %s1062 = sor.u32 256, 88
        %1063 = vbcast.lane.b32.xlu0 %v1017, %s1062
        %v1064 = vpop.permute.xlu0 %1063
        %s1066 = sor.u32 256, 96
        %1067 = vbcast.lane.b32.xlu0 %v1017, %s1066
        %v1068 = vpop.permute.xlu0 %1067
        %s1070 = sor.u32 256, 104
        %1071 = vbcast.lane.b32.xlu0 %v1017, %s1070
        %v1072 = vpop.permute.xlu0 %1071
        %s1074 = sor.u32 256, 112
        %1075 = vbcast.lane.b32.xlu0 %v1017, %s1074
        %v1076 = vpop.permute.xlu0 %1075
        %s1078 = sor.u32 256, 120
        %1079 = vbcast.lane.b32.xlu0 %v1017, %s1078
        %v1080 = vpop.permute.xlu0 %1079
        %v1081 = vlaneseq
        %v1082 = vshrl.u32 %v1081, 7
        %v1083 = vsub.s32 5, %v1082
        %v1084 = vrot.slane %v243, %v1083
        %1086 = vbcast.lane.b32.xlu0 %v1084, 256
        %v1087 = vpop.permute.xlu0 %1086
        %s1089 = sor.u32 256, 8
        %1090 = vbcast.lane.b32.xlu0 %v1084, %s1089
        %v1091 = vpop.permute.xlu0 %1090
        %s1093 = sor.u32 256, 16
        %1094 = vbcast.lane.b32.xlu0 %v1084, %s1093
        %v1095 = vpop.permute.xlu0 %1094
        %s1097 = sor.u32 256, 24
        %1098 = vbcast.lane.b32.xlu0 %v1084, %s1097
        %v1099 = vpop.permute.xlu0 %1098
        %s1101 = sor.u32 256, 32
        %1102 = vbcast.lane.b32.xlu0 %v1084, %s1101
        %v1103 = vpop.permute.xlu0 %1102
        %s1105 = sor.u32 256, 40
        %1106 = vbcast.lane.b32.xlu0 %v1084, %s1105
        %v1107 = vpop.permute.xlu0 %1106
        %s1109 = sor.u32 256, 48
        %1110 = vbcast.lane.b32.xlu0 %v1084, %s1109
        %v1111 = vpop.permute.xlu0 %1110
        %s1113 = sor.u32 256, 56
        %1114 = vbcast.lane.b32.xlu0 %v1084, %s1113
        %v1115 = vpop.permute.xlu0 %1114
        %s1117 = sor.u32 256, 64
        %1118 = vbcast.lane.b32.xlu0 %v1084, %s1117
        %v1119 = vpop.permute.xlu0 %1118
        %s1121 = sor.u32 256, 72
        %1122 = vbcast.lane.b32.xlu0 %v1084, %s1121
        %v1123 = vpop.permute.xlu0 %1122
        %s1125 = sor.u32 256, 80
        %1126 = vbcast.lane.b32.xlu0 %v1084, %s1125
        %v1127 = vpop.permute.xlu0 %1126
        %s1129 = sor.u32 256, 88
        %1130 = vbcast.lane.b32.xlu0 %v1084, %s1129
        %v1131 = vpop.permute.xlu0 %1130
        %s1133 = sor.u32 256, 96
        %1134 = vbcast.lane.b32.xlu0 %v1084, %s1133
        %v1135 = vpop.permute.xlu0 %1134
        %s1137 = sor.u32 256, 104
        %1138 = vbcast.lane.b32.xlu0 %v1084, %s1137
        %v1139 = vpop.permute.xlu0 %1138
        %s1141 = sor.u32 256, 112
        %1142 = vbcast.lane.b32.xlu0 %v1084, %s1141
        %v1143 = vpop.permute.xlu0 %1142
        %s1145 = sor.u32 256, 120
        %1146 = vbcast.lane.b32.xlu0 %v1084, %s1145
        %v1147 = vpop.permute.xlu0 %1146
        %v1148 = vlaneseq
        %v1149 = vshrl.u32 %v1148, 7
        %v1150 = vsub.s32 5, %v1149
        %v1151 = vrot.slane %v244, %v1150
        %1153 = vbcast.lane.b32.xlu0 %v1151, 256
        %v1154 = vpop.permute.xlu0 %1153
        %s1156 = sor.u32 256, 8
        %1157 = vbcast.lane.b32.xlu0 %v1151, %s1156
        %v1158 = vpop.permute.xlu0 %1157
        %s1160 = sor.u32 256, 16
        %1161 = vbcast.lane.b32.xlu0 %v1151, %s1160
        %v1162 = vpop.permute.xlu0 %1161
        %s1164 = sor.u32 256, 24
        %1165 = vbcast.lane.b32.xlu0 %v1151, %s1164
        %v1166 = vpop.permute.xlu0 %1165
        %s1168 = sor.u32 256, 32
        %1169 = vbcast.lane.b32.xlu0 %v1151, %s1168
        %v1170 = vpop.permute.xlu0 %1169
        %s1172 = sor.u32 256, 40
        %1173 = vbcast.lane.b32.xlu0 %v1151, %s1172
        %v1174 = vpop.permute.xlu0 %1173
        %s1176 = sor.u32 256, 48
        %1177 = vbcast.lane.b32.xlu0 %v1151, %s1176
        %v1178 = vpop.permute.xlu0 %1177
        %s1180 = sor.u32 256, 56
        %1181 = vbcast.lane.b32.xlu0 %v1151, %s1180
        %v1182 = vpop.permute.xlu0 %1181
        %s1184 = sor.u32 256, 64
        %1185 = vbcast.lane.b32.xlu0 %v1151, %s1184
        %v1186 = vpop.permute.xlu0 %1185
        %s1188 = sor.u32 256, 72
        %1189 = vbcast.lane.b32.xlu0 %v1151, %s1188
        %v1190 = vpop.permute.xlu0 %1189
        %s1192 = sor.u32 256, 80
        %1193 = vbcast.lane.b32.xlu0 %v1151, %s1192
        %v1194 = vpop.permute.xlu0 %1193
        %s1196 = sor.u32 256, 88
        %1197 = vbcast.lane.b32.xlu0 %v1151, %s1196
        %v1198 = vpop.permute.xlu0 %1197
        %s1200 = sor.u32 256, 96
        %1201 = vbcast.lane.b32.xlu0 %v1151, %s1200
        %v1202 = vpop.permute.xlu0 %1201
        %s1204 = sor.u32 256, 104
        %1205 = vbcast.lane.b32.xlu0 %v1151, %s1204
        %v1206 = vpop.permute.xlu0 %1205
        %s1208 = sor.u32 256, 112
        %1209 = vbcast.lane.b32.xlu0 %v1151, %s1208
        %v1210 = vpop.permute.xlu0 %1209
        %s1212 = sor.u32 256, 120
        %1213 = vbcast.lane.b32.xlu0 %v1151, %s1212
        %v1214 = vpop.permute.xlu0 %1213
        %v1215 = vlaneseq
        %v1216 = vshrl.u32 %v1215, 7
        %v1217 = vsub.s32 6, %v1216
        %v1218 = vrot.slane %v243, %v1217
        %1220 = vbcast.lane.b32.xlu0 %v1218, 256
        %v1221 = vpop.permute.xlu0 %1220
        %s1223 = sor.u32 256, 8
        %1224 = vbcast.lane.b32.xlu0 %v1218, %s1223
        %v1225 = vpop.permute.xlu0 %1224
        %s1227 = sor.u32 256, 16
        %1228 = vbcast.lane.b32.xlu0 %v1218, %s1227
        %v1229 = vpop.permute.xlu0 %1228
        %s1231 = sor.u32 256, 24
        %1232 = vbcast.lane.b32.xlu0 %v1218, %s1231
        %v1233 = vpop.permute.xlu0 %1232
        %s1235 = sor.u32 256, 32
        %1236 = vbcast.lane.b32.xlu0 %v1218, %s1235
        %v1237 = vpop.permute.xlu0 %1236
        %s1239 = sor.u32 256, 40
        %1240 = vbcast.lane.b32.xlu0 %v1218, %s1239
        %v1241 = vpop.permute.xlu0 %1240
        %s1243 = sor.u32 256, 48
        %1244 = vbcast.lane.b32.xlu0 %v1218, %s1243
        %v1245 = vpop.permute.xlu0 %1244
        %s1247 = sor.u32 256, 56
        %1248 = vbcast.lane.b32.xlu0 %v1218, %s1247
        %v1249 = vpop.permute.xlu0 %1248
        %s1251 = sor.u32 256, 64
        %1252 = vbcast.lane.b32.xlu0 %v1218, %s1251
        %v1253 = vpop.permute.xlu0 %1252
        %s1255 = sor.u32 256, 72
        %1256 = vbcast.lane.b32.xlu0 %v1218, %s1255
        %v1257 = vpop.permute.xlu0 %1256
        %s1259 = sor.u32 256, 80
        %1260 = vbcast.lane.b32.xlu0 %v1218, %s1259
        %v1261 = vpop.permute.xlu0 %1260
        %s1263 = sor.u32 256, 88
        %1264 = vbcast.lane.b32.xlu0 %v1218, %s1263
        %v1265 = vpop.permute.xlu0 %1264
        %s1267 = sor.u32 256, 96
        %1268 = vbcast.lane.b32.xlu0 %v1218, %s1267
        %v1269 = vpop.permute.xlu0 %1268
        %s1271 = sor.u32 256, 104
        %1272 = vbcast.lane.b32.xlu0 %v1218, %s1271
        %v1273 = vpop.permute.xlu0 %1272
        %s1275 = sor.u32 256, 112
        %1276 = vbcast.lane.b32.xlu0 %v1218, %s1275
        %v1277 = vpop.permute.xlu0 %1276
        %s1279 = sor.u32 256, 120
        %1280 = vbcast.lane.b32.xlu0 %v1218, %s1279
        %v1281 = vpop.permute.xlu0 %1280
        %v1282 = vlaneseq
        %v1283 = vshrl.u32 %v1282, 7
        %v1284 = vsub.s32 6, %v1283
        %v1285 = vrot.slane %v244, %v1284
        %1287 = vbcast.lane.b32.xlu0 %v1285, 256
        %v1288 = vpop.permute.xlu0 %1287
        %s1290 = sor.u32 256, 8
        %1291 = vbcast.lane.b32.xlu0 %v1285, %s1290
        %v1292 = vpop.permute.xlu0 %1291
        %s1294 = sor.u32 256, 16
        %1295 = vbcast.lane.b32.xlu0 %v1285, %s1294
        %v1296 = vpop.permute.xlu0 %1295
        %s1298 = sor.u32 256, 24
        %1299 = vbcast.lane.b32.xlu0 %v1285, %s1298
        %v1300 = vpop.permute.xlu0 %1299
        %s1302 = sor.u32 256, 32
        %1303 = vbcast.lane.b32.xlu0 %v1285, %s1302
        %v1304 = vpop.permute.xlu0 %1303
        %s1306 = sor.u32 256, 40
        %1307 = vbcast.lane.b32.xlu0 %v1285, %s1306
        %v1308 = vpop.permute.xlu0 %1307
        %s1310 = sor.u32 256, 48
        %1311 = vbcast.lane.b32.xlu0 %v1285, %s1310
        %v1312 = vpop.permute.xlu0 %1311
        %s1314 = sor.u32 256, 56
        %1315 = vbcast.lane.b32.xlu0 %v1285, %s1314
        %v1316 = vpop.permute.xlu0 %1315
        %s1318 = sor.u32 256, 64
        %1319 = vbcast.lane.b32.xlu0 %v1285, %s1318
        %v1320 = vpop.permute.xlu0 %1319
        %s1322 = sor.u32 256, 72
        %1323 = vbcast.lane.b32.xlu0 %v1285, %s1322
        %v1324 = vpop.permute.xlu0 %1323
        %s1326 = sor.u32 256, 80
        %1327 = vbcast.lane.b32.xlu0 %v1285, %s1326
        %v1328 = vpop.permute.xlu0 %1327
        %s1330 = sor.u32 256, 88
        %1331 = vbcast.lane.b32.xlu0 %v1285, %s1330
        %v1332 = vpop.permute.xlu0 %1331
        %s1334 = sor.u32 256, 96
        %1335 = vbcast.lane.b32.xlu0 %v1285, %s1334
        %v1336 = vpop.permute.xlu0 %1335
        %s1338 = sor.u32 256, 104
        %1339 = vbcast.lane.b32.xlu0 %v1285, %s1338
        %v1340 = vpop.permute.xlu0 %1339
        %s1342 = sor.u32 256, 112
        %1343 = vbcast.lane.b32.xlu0 %v1285, %s1342
        %v1344 = vpop.permute.xlu0 %1343
        %s1346 = sor.u32 256, 120
        %1347 = vbcast.lane.b32.xlu0 %v1285, %s1346
        %v1348 = vpop.permute.xlu0 %1347
        %v1349 = vlaneseq
        %v1350 = vshrl.u32 %v1349, 7
        %v1351 = vsub.s32 7, %v1350
        %v1352 = vrot.slane %v243, %v1351
        %1354 = vbcast.lane.b32.xlu0 %v1352, 256
        %v1355 = vpop.permute.xlu0 %1354
        %s1357 = sor.u32 256, 8
        %1358 = vbcast.lane.b32.xlu0 %v1352, %s1357
        %v1359 = vpop.permute.xlu0 %1358
        %s1361 = sor.u32 256, 16
        %1362 = vbcast.lane.b32.xlu0 %v1352, %s1361
        %v1363 = vpop.permute.xlu0 %1362
        %s1365 = sor.u32 256, 24
        %1366 = vbcast.lane.b32.xlu0 %v1352, %s1365
        %v1367 = vpop.permute.xlu0 %1366
        %s1369 = sor.u32 256, 32
        %1370 = vbcast.lane.b32.xlu0 %v1352, %s1369
        %v1371 = vpop.permute.xlu0 %1370
        %s1373 = sor.u32 256, 40
        %1374 = vbcast.lane.b32.xlu0 %v1352, %s1373
        %v1375 = vpop.permute.xlu0 %1374
        %s1377 = sor.u32 256, 48
        %1378 = vbcast.lane.b32.xlu0 %v1352, %s1377
        %v1379 = vpop.permute.xlu0 %1378
        %s1381 = sor.u32 256, 56
        %1382 = vbcast.lane.b32.xlu0 %v1352, %s1381
        %v1383 = vpop.permute.xlu0 %1382
        %s1385 = sor.u32 256, 64
        %1386 = vbcast.lane.b32.xlu0 %v1352, %s1385
        %v1387 = vpop.permute.xlu0 %1386
        %s1389 = sor.u32 256, 72
        %1390 = vbcast.lane.b32.xlu0 %v1352, %s1389
        %v1391 = vpop.permute.xlu0 %1390
        %s1393 = sor.u32 256, 80
        %1394 = vbcast.lane.b32.xlu0 %v1352, %s1393
        %v1395 = vpop.permute.xlu0 %1394
        %s1397 = sor.u32 256, 88
        %1398 = vbcast.lane.b32.xlu0 %v1352, %s1397
        %v1399 = vpop.permute.xlu0 %1398
        %s1401 = sor.u32 256, 96
        %1402 = vbcast.lane.b32.xlu0 %v1352, %s1401
        %v1403 = vpop.permute.xlu0 %1402
        %s1405 = sor.u32 256, 104
        %1406 = vbcast.lane.b32.xlu0 %v1352, %s1405
        %v1407 = vpop.permute.xlu0 %1406
        %s1409 = sor.u32 256, 112
        %1410 = vbcast.lane.b32.xlu0 %v1352, %s1409
        %v1411 = vpop.permute.xlu0 %1410
        %s1413 = sor.u32 256, 120
        %1414 = vbcast.lane.b32.xlu0 %v1352, %s1413
        %v1415 = vpop.permute.xlu0 %1414
        %v1416 = vlaneseq
        %v1417 = vshrl.u32 %v1416, 7
        %v1418 = vsub.s32 7, %v1417
        %v1419 = vrot.slane %v244, %v1418
        %1421 = vbcast.lane.b32.xlu0 %v1419, 256
        %v1422 = vpop.permute.xlu0 %1421
        %s1424 = sor.u32 256, 8
        %1425 = vbcast.lane.b32.xlu0 %v1419, %s1424
        %v1426 = vpop.permute.xlu0 %1425
        %s1428 = sor.u32 256, 16
        %1429 = vbcast.lane.b32.xlu0 %v1419, %s1428
        %v1430 = vpop.permute.xlu0 %1429
        %s1432 = sor.u32 256, 24
        %1433 = vbcast.lane.b32.xlu0 %v1419, %s1432
        %v1434 = vpop.permute.xlu0 %1433
        %s1436 = sor.u32 256, 32
        %1437 = vbcast.lane.b32.xlu0 %v1419, %s1436
        %v1438 = vpop.permute.xlu0 %1437
        %s1440 = sor.u32 256, 40
        %1441 = vbcast.lane.b32.xlu0 %v1419, %s1440
        %v1442 = vpop.permute.xlu0 %1441
        %s1444 = sor.u32 256, 48
        %1445 = vbcast.lane.b32.xlu0 %v1419, %s1444
        %v1446 = vpop.permute.xlu0 %1445
        %s1448 = sor.u32 256, 56
        %1449 = vbcast.lane.b32.xlu0 %v1419, %s1448
        %v1450 = vpop.permute.xlu0 %1449
        %s1452 = sor.u32 256, 64
        %1453 = vbcast.lane.b32.xlu0 %v1419, %s1452
        %v1454 = vpop.permute.xlu0 %1453
        %s1456 = sor.u32 256, 72
        %1457 = vbcast.lane.b32.xlu0 %v1419, %s1456
        %v1458 = vpop.permute.xlu0 %1457
        %s1460 = sor.u32 256, 80
        %1461 = vbcast.lane.b32.xlu0 %v1419, %s1460
        %v1462 = vpop.permute.xlu0 %1461
        %s1464 = sor.u32 256, 88
        %1465 = vbcast.lane.b32.xlu0 %v1419, %s1464
        %v1466 = vpop.permute.xlu0 %1465
        %s1468 = sor.u32 256, 96
        %1469 = vbcast.lane.b32.xlu0 %v1419, %s1468
        %v1470 = vpop.permute.xlu0 %1469
        %s1472 = sor.u32 256, 104
        %1473 = vbcast.lane.b32.xlu0 %v1419, %s1472
        %v1474 = vpop.permute.xlu0 %1473
        %s1476 = sor.u32 256, 112
        %1477 = vbcast.lane.b32.xlu0 %v1419, %s1476
        %v1478 = vpop.permute.xlu0 %1477
        %s1480 = sor.u32 256, 120
        %1481 = vbcast.lane.b32.xlu0 %v1419, %s1480
        %v1482 = vpop.permute.xlu0 %1481
        %v1483 = vsel %vm379, 1, 0
        %v1484 = vsel %vm380, 1, 0
        %v1485 = vsel %vm381, 1, 0
        %v1486 = vsel %vm382, 1, 0
        %v1487 = vsel %vm383, 1, 0
        %v1488 = vsel %vm384, 1, 0
        %v1489 = vsel %vm385, 1, 0
        %v1490 = vsel %vm386, 1, 0
        %v1491 = vsel %vm387, 1, 0
        %v1492 = vsel %vm388, 1, 0
        %v1493 = vsel %vm389, 1, 0
        %v1494 = vsel %vm390, 1, 0
        %v1495 = vsel %vm391, 1, 0
        %v1496 = vsel %vm392, 1, 0
        %v1497 = vsel %vm393, 1, 0
        %v1498 = vsel %vm394, 1, 0
        %v1499 = vsel %vm395, 1, 0
        %v1500 = vsel %vm396, 1, 0
        %v1501 = vsel %vm397, 1, 0
        %v1502 = vsel %vm398, 1, 0
        %v1503 = vsel %vm399, 1, 0
        %v1504 = vsel %vm400, 1, 0
        %v1505 = vsel %vm401, 1, 0
        %v1506 = vsel %vm402, 1, 0
        %v1507 = vsel %vm403, 1, 0
        %v1508 = vsel %vm404, 1, 0
        %v1509 = vsel %vm405, 1, 0
        %v1510 = vsel %vm406, 1, 0
        %v1511 = vsel %vm407, 1, 0
        %v1512 = vsel %vm408, 1, 0
        %v1513 = vsel %vm409, 1, 0
        %v1514 = vsel %vm410, 1, 0
        %vm1515 = vcmp.eq.s32.totalorder %v1483, 1
        %vm1516 = vcmp.eq.s32.totalorder %v1484, 1
        %vm1517 = vcmp.eq.s32.totalorder %v1485, 1
        %vm1518 = vcmp.eq.s32.totalorder %v1486, 1
        %vm1519 = vcmp.eq.s32.totalorder %v1487, 1
        %vm1520 = vcmp.eq.s32.totalorder %v1488, 1
        %vm1521 = vcmp.eq.s32.totalorder %v1489, 1
        %vm1522 = vcmp.eq.s32.totalorder %v1490, 1
        %vm1523 = vcmp.eq.s32.totalorder %v1491, 1
        %vm1524 = vcmp.eq.s32.totalorder %v1492, 1
        %vm1525 = vcmp.eq.s32.totalorder %v1493, 1
        %vm1526 = vcmp.eq.s32.totalorder %v1494, 1
        %vm1527 = vcmp.eq.s32.totalorder %v1495, 1
        %vm1528 = vcmp.eq.s32.totalorder %v1496, 1
        %vm1529 = vcmp.eq.s32.totalorder %v1497, 1
        %vm1530 = vcmp.eq.s32.totalorder %v1498, 1
        %vm1531 = vcmp.eq.s32.totalorder %v1499, 1
        %vm1532 = vcmp.eq.s32.totalorder %v1500, 1
        %vm1533 = vcmp.eq.s32.totalorder %v1501, 1
        %vm1534 = vcmp.eq.s32.totalorder %v1502, 1
        %vm1535 = vcmp.eq.s32.totalorder %v1503, 1
        %vm1536 = vcmp.eq.s32.totalorder %v1504, 1
        %vm1537 = vcmp.eq.s32.totalorder %v1505, 1
        %vm1538 = vcmp.eq.s32.totalorder %v1506, 1
        %vm1539 = vcmp.eq.s32.totalorder %v1507, 1
        %vm1540 = vcmp.eq.s32.totalorder %v1508, 1
        %vm1541 = vcmp.eq.s32.totalorder %v1509, 1
        %vm1542 = vcmp.eq.s32.totalorder %v1510, 1
        %vm1543 = vcmp.eq.s32.totalorder %v1511, 1
        %vm1544 = vcmp.eq.s32.totalorder %v1512, 1
        %vm1545 = vcmp.eq.s32.totalorder %v1513, 1
        %vm1546 = vcmp.eq.s32.totalorder %v1514, 1
        %v1547 = vsel %vm1515, %v417, 0.0
        %v1548 = vsel %vm1516, %v421, 0.0
        %v1549 = vsel %vm1517, %v425, 0.0
        %v1550 = vsel %vm1518, %v429, 0.0
        %v1551 = vsel %vm1519, %v433, 0.0
        %v1552 = vsel %vm1520, %v437, 0.0
        %v1553 = vsel %vm1521, %v441, 0.0
        %v1554 = vsel %vm1522, %v445, 0.0
        %v1555 = vsel %vm1523, %v449, 0.0
        %v1556 = vsel %vm1524, %v453, 0.0
        %v1557 = vsel %vm1525, %v457, 0.0
        %v1558 = vsel %vm1526, %v461, 0.0
        %v1559 = vsel %vm1527, %v465, 0.0
        %v1560 = vsel %vm1528, %v469, 0.0
        %v1561 = vsel %vm1529, %v473, 0.0
        %v1562 = vsel %vm1530, %v477, 0.0
        %v1563 = vsel %vm1531, %v484, 0.0
        %v1564 = vsel %vm1532, %v488, 0.0
        %v1565 = vsel %vm1533, %v492, 0.0
        %v1566 = vsel %vm1534, %v496, 0.0
        %v1567 = vsel %vm1535, %v500, 0.0
        %v1568 = vsel %vm1536, %v504, 0.0
        %v1569 = vsel %vm1537, %v508, 0.0
        %v1570 = vsel %vm1538, %v512, 0.0
        %v1571 = vsel %vm1539, %v516, 0.0
        %v1572 = vsel %vm1540, %v520, 0.0
        %v1573 = vsel %vm1541, %v524, 0.0
        %v1574 = vsel %vm1542, %v528, 0.0
        %v1575 = vsel %vm1543, %v532, 0.0
        %v1576 = vsel %vm1544, %v536, 0.0
        %v1577 = vsel %vm1545, %v540, 0.0
        %v1578 = vsel %vm1546, %v544, 0.0
        %v1579 = vsel %vm1515, %v551, 0.0
        %v1580 = vsel %vm1516, %v555, 0.0
        %v1581 = vsel %vm1517, %v559, 0.0
        %v1582 = vsel %vm1518, %v563, 0.0
        %v1583 = vsel %vm1519, %v567, 0.0
        %v1584 = vsel %vm1520, %v571, 0.0
        %v1585 = vsel %vm1521, %v575, 0.0
        %v1586 = vsel %vm1522, %v579, 0.0
        %v1587 = vsel %vm1523, %v583, 0.0
        %v1588 = vsel %vm1524, %v587, 0.0
        %v1589 = vsel %vm1525, %v591, 0.0
        %v1590 = vsel %vm1526, %v595, 0.0
        %v1591 = vsel %vm1527, %v599, 0.0
        %v1592 = vsel %vm1528, %v603, 0.0
        %v1593 = vsel %vm1529, %v607, 0.0
        %v1594 = vsel %vm1530, %v611, 0.0
        %v1595 = vsel %vm1531, %v618, 0.0
        %v1596 = vsel %vm1532, %v622, 0.0
        %v1597 = vsel %vm1533, %v626, 0.0
        %v1598 = vsel %vm1534, %v630, 0.0
        %v1599 = vsel %vm1535, %v634, 0.0
        %v1600 = vsel %vm1536, %v638, 0.0
        %v1601 = vsel %vm1537, %v642, 0.0
        %v1602 = vsel %vm1538, %v646, 0.0
        %v1603 = vsel %vm1539, %v650, 0.0
        %v1604 = vsel %vm1540, %v654, 0.0
        %v1605 = vsel %vm1541, %v658, 0.0
        %v1606 = vsel %vm1542, %v662, 0.0
        %v1607 = vsel %vm1543, %v666, 0.0
        %v1608 = vsel %vm1544, %v670, 0.0
        %v1609 = vsel %vm1545, %v674, 0.0
        %v1610 = vsel %vm1546, %v678, 0.0
        %v1611 = vsel %vm1515, %v685, 0.0
        %v1612 = vsel %vm1516, %v689, 0.0
        %v1613 = vsel %vm1517, %v693, 0.0
        %v1614 = vsel %vm1518, %v697, 0.0
        %v1615 = vsel %vm1519, %v701, 0.0
        %v1616 = vsel %vm1520, %v705, 0.0
        %v1617 = vsel %vm1521, %v709, 0.0
        %v1618 = vsel %vm1522, %v713, 0.0
        %v1619 = vsel %vm1523, %v717, 0.0
        %v1620 = vsel %vm1524, %v721, 0.0
        %v1621 = vsel %vm1525, %v725, 0.0
        %v1622 = vsel %vm1526, %v729, 0.0
        %v1623 = vsel %vm1527, %v733, 0.0
        %v1624 = vsel %vm1528, %v737, 0.0
        %v1625 = vsel %vm1529, %v741, 0.0
        %v1626 = vsel %vm1530, %v745, 0.0
        %v1627 = vsel %vm1531, %v752, 0.0
        %v1628 = vsel %vm1532, %v756, 0.0
        %v1629 = vsel %vm1533, %v760, 0.0
        %v1630 = vsel %vm1534, %v764, 0.0
        %v1631 = vsel %vm1535, %v768, 0.0
        %v1632 = vsel %vm1536, %v772, 0.0
        %v1633 = vsel %vm1537, %v776, 0.0
        %v1634 = vsel %vm1538, %v780, 0.0
        %v1635 = vsel %vm1539, %v784, 0.0
        %v1636 = vsel %vm1540, %v788, 0.0
        %v1637 = vsel %vm1541, %v792, 0.0
        %v1638 = vsel %vm1542, %v796, 0.0
        %v1639 = vsel %vm1543, %v800, 0.0
        %v1640 = vsel %vm1544, %v804, 0.0
        %v1641 = vsel %vm1545, %v808, 0.0
        %v1642 = vsel %vm1546, %v812, 0.0
        %v1643 = vsel %vm1515, %v819, 0.0
        %v1644 = vsel %vm1516, %v823, 0.0
        %v1645 = vsel %vm1517, %v827, 0.0
        %v1646 = vsel %vm1518, %v831, 0.0
        %v1647 = vsel %vm1519, %v835, 0.0
        %v1648 = vsel %vm1520, %v839, 0.0
        %v1649 = vsel %vm1521, %v843, 0.0
        %v1650 = vsel %vm1522, %v847, 0.0
        %v1651 = vsel %vm1523, %v851, 0.0
        %v1652 = vsel %vm1524, %v855, 0.0
        %v1653 = vsel %vm1525, %v859, 0.0
        %v1654 = vsel %vm1526, %v863, 0.0
        %v1655 = vsel %vm1527, %v867, 0.0
        %v1656 = vsel %vm1528, %v871, 0.0
        %v1657 = vsel %vm1529, %v875, 0.0
        %v1658 = vsel %vm1530, %v879, 0.0
        %v1659 = vsel %vm1531, %v886, 0.0
        %v1660 = vsel %vm1532, %v890, 0.0
        %v1661 = vsel %vm1533, %v894, 0.0
        %v1662 = vsel %vm1534, %v898, 0.0
        %v1663 = vsel %vm1535, %v902, 0.0
        %v1664 = vsel %vm1536, %v906, 0.0
        %v1665 = vsel %vm1537, %v910, 0.0
        %v1666 = vsel %vm1538, %v914, 0.0
        %v1667 = vsel %vm1539, %v918, 0.0
        %v1668 = vsel %vm1540, %v922, 0.0
        %v1669 = vsel %vm1541, %v926, 0.0
        %v1670 = vsel %vm1542, %v930, 0.0
        %v1671 = vsel %vm1543, %v934, 0.0
        %v1672 = vsel %vm1544, %v938, 0.0
        %v1673 = vsel %vm1545, %v942, 0.0
        %v1674 = vsel %vm1546, %v946, 0.0
        %v1675 = vsel %vm1515, %v953, 0.0
        %v1676 = vsel %vm1516, %v957, 0.0
        %v1677 = vsel %vm1517, %v961, 0.0
        %v1678 = vsel %vm1518, %v965, 0.0
        %v1679 = vsel %vm1519, %v969, 0.0
        %v1680 = vsel %vm1520, %v973, 0.0
        %v1681 = vsel %vm1521, %v977, 0.0
        %v1682 = vsel %vm1522, %v981, 0.0
        %v1683 = vsel %vm1523, %v985, 0.0
        %v1684 = vsel %vm1524, %v989, 0.0
        %v1685 = vsel %vm1525, %v993, 0.0
        %v1686 = vsel %vm1526, %v997, 0.0
        %v1687 = vsel %vm1527, %v1001, 0.0
        %v1688 = vsel %vm1528, %v1005, 0.0
        %v1689 = vsel %vm1529, %v1009, 0.0
        %v1690 = vsel %vm1530, %v1013, 0.0
        %v1691 = vsel %vm1531, %v1020, 0.0
        %v1692 = vsel %vm1532, %v1024, 0.0
        %v1693 = vsel %vm1533, %v1028, 0.0
        %v1694 = vsel %vm1534, %v1032, 0.0
        %v1695 = vsel %vm1535, %v1036, 0.0
        %v1696 = vsel %vm1536, %v1040, 0.0
        %v1697 = vsel %vm1537, %v1044, 0.0
        %v1698 = vsel %vm1538, %v1048, 0.0
        %v1699 = vsel %vm1539, %v1052, 0.0
        %v1700 = vsel %vm1540, %v1056, 0.0
        %v1701 = vsel %vm1541, %v1060, 0.0
        %v1702 = vsel %vm1542, %v1064, 0.0
        %v1703 = vsel %vm1543, %v1068, 0.0
        %v1704 = vsel %vm1544, %v1072, 0.0
        %v1705 = vsel %vm1545, %v1076, 0.0
        %v1706 = vsel %vm1546, %v1080, 0.0
        %v1707 = vsel %vm1515, %v1087, 0.0
        %v1708 = vsel %vm1516, %v1091, 0.0
        %v1709 = vsel %vm1517, %v1095, 0.0
        %v1710 = vsel %vm1518, %v1099, 0.0
        %v1711 = vsel %vm1519, %v1103, 0.0
        %v1712 = vsel %vm1520, %v1107, 0.0
        %v1713 = vsel %vm1521, %v1111, 0.0
        %v1714 = vsel %vm1522, %v1115, 0.0
        %v1715 = vsel %vm1523, %v1119, 0.0
        %v1716 = vsel %vm1524, %v1123, 0.0
        %v1717 = vsel %vm1525, %v1127, 0.0
        %v1718 = vsel %vm1526, %v1131, 0.0
        %v1719 = vsel %vm1527, %v1135, 0.0
        %v1720 = vsel %vm1528, %v1139, 0.0
        %v1721 = vsel %vm1529, %v1143, 0.0
        %v1722 = vsel %vm1530, %v1147, 0.0
        %v1723 = vsel %vm1531, %v1154, 0.0
        %v1724 = vsel %vm1532, %v1158, 0.0
        %v1725 = vsel %vm1533, %v1162, 0.0
        %v1726 = vsel %vm1534, %v1166, 0.0
        %v1727 = vsel %vm1535, %v1170, 0.0
        %v1728 = vsel %vm1536, %v1174, 0.0
        %v1729 = vsel %vm1537, %v1178, 0.0
        %v1730 = vsel %vm1538, %v1182, 0.0
        %v1731 = vsel %vm1539, %v1186, 0.0
        %v1732 = vsel %vm1540, %v1190, 0.0
        %v1733 = vsel %vm1541, %v1194, 0.0
        %v1734 = vsel %vm1542, %v1198, 0.0
        %v1735 = vsel %vm1543, %v1202, 0.0
        %v1736 = vsel %vm1544, %v1206, 0.0
        %v1737 = vsel %vm1545, %v1210, 0.0
        %v1738 = vsel %vm1546, %v1214, 0.0
        %v1739 = vsel %vm1515, %v1221, 0.0
        %v1740 = vsel %vm1516, %v1225, 0.0
        %v1741 = vsel %vm1517, %v1229, 0.0
        %v1742 = vsel %vm1518, %v1233, 0.0
        %v1743 = vsel %vm1519, %v1237, 0.0
        %v1744 = vsel %vm1520, %v1241, 0.0
        %v1745 = vsel %vm1521, %v1245, 0.0
        %v1746 = vsel %vm1522, %v1249, 0.0
        %v1747 = vsel %vm1523, %v1253, 0.0
        %v1748 = vsel %vm1524, %v1257, 0.0
        %v1749 = vsel %vm1525, %v1261, 0.0
        %v1750 = vsel %vm1526, %v1265, 0.0
        %v1751 = vsel %vm1527, %v1269, 0.0
        %v1752 = vsel %vm1528, %v1273, 0.0
        %v1753 = vsel %vm1529, %v1277, 0.0
        %v1754 = vsel %vm1530, %v1281, 0.0
        %v1755 = vsel %vm1531, %v1288, 0.0
        %v1756 = vsel %vm1532, %v1292, 0.0
        %v1757 = vsel %vm1533, %v1296, 0.0
        %v1758 = vsel %vm1534, %v1300, 0.0
        %v1759 = vsel %vm1535, %v1304, 0.0
        %v1760 = vsel %vm1536, %v1308, 0.0
        %v1761 = vsel %vm1537, %v1312, 0.0
        %v1762 = vsel %vm1538, %v1316, 0.0
        %v1763 = vsel %vm1539, %v1320, 0.0
        %v1764 = vsel %vm1540, %v1324, 0.0
        %v1765 = vsel %vm1541, %v1328, 0.0
        %v1766 = vsel %vm1542, %v1332, 0.0
        %v1767 = vsel %vm1543, %v1336, 0.0
        %v1768 = vsel %vm1544, %v1340, 0.0
        %v1769 = vsel %vm1545, %v1344, 0.0
        %v1770 = vsel %vm1546, %v1348, 0.0
        %v1771 = vsel %vm1515, %v1355, 0.0
        %v1772 = vsel %vm1516, %v1359, 0.0
        %v1773 = vsel %vm1517, %v1363, 0.0
        %v1774 = vsel %vm1518, %v1367, 0.0
        %v1775 = vsel %vm1519, %v1371, 0.0
        %v1776 = vsel %vm1520, %v1375, 0.0
        %v1777 = vsel %vm1521, %v1379, 0.0
        %v1778 = vsel %vm1522, %v1383, 0.0
        %v1779 = vsel %vm1523, %v1387, 0.0
        %v1780 = vsel %vm1524, %v1391, 0.0
        %v1781 = vsel %vm1525, %v1395, 0.0
        %v1782 = vsel %vm1526, %v1399, 0.0
        %v1783 = vsel %vm1527, %v1403, 0.0
        %v1784 = vsel %vm1528, %v1407, 0.0
        %v1785 = vsel %vm1529, %v1411, 0.0
        %v1786 = vsel %vm1530, %v1415, 0.0
        %v1787 = vsel %vm1531, %v1422, 0.0
        %v1788 = vsel %vm1532, %v1426, 0.0
        %v1789 = vsel %vm1533, %v1430, 0.0
        %v1790 = vsel %vm1534, %v1434, 0.0
        %v1791 = vsel %vm1535, %v1438, 0.0
        %v1792 = vsel %vm1536, %v1442, 0.0
        %v1793 = vsel %vm1537, %v1446, 0.0
        %v1794 = vsel %vm1538, %v1450, 0.0
        %v1795 = vsel %vm1539, %v1454, 0.0
        %v1796 = vsel %vm1540, %v1458, 0.0
        %v1797 = vsel %vm1541, %v1462, 0.0
        %v1798 = vsel %vm1542, %v1466, 0.0
        %v1799 = vsel %vm1543, %v1470, 0.0
        %v1800 = vsel %vm1544, %v1474, 0.0
        %v1801 = vsel %vm1545, %v1478, 0.0
        %v1802 = vsel %vm1546, %v1482, 0.0
        %v1803 = vld [vmem:[#allocation2] sm:$0xff]
        %v1804 = vmax.f32 %v1547, %v1548
        %v1805 = vmax.f32 %v1804, %v1549
        %v1806 = vmax.f32 %v1805, %v1550
        %v1807 = vmax.f32 %v1806, %v1551
        %v1808 = vmax.f32 %v1807, %v1552
        %v1809 = vmax.f32 %v1808, %v1553
        %v1810 = vmax.f32 %v1809, %v1554
        %v1811 = vmax.f32 %v1810, %v1555
        %v1812 = vmax.f32 %v1811, %v1556
        %v1813 = vmax.f32 %v1812, %v1557
        %v1814 = vmax.f32 %v1813, %v1558
        %v1815 = vmax.f32 %v1814, %v1559
        %v1816 = vmax.f32 %v1815, %v1560
        %v1817 = vmax.f32 %v1816, %v1561
        %v1818 = vmax.f32 %v1817, %v1562
        %v1819 = vmax.f32 %v1818, %v1563
        %v1820 = vmax.f32 %v1819, %v1564
        %v1821 = vmax.f32 %v1820, %v1565
        %v1822 = vmax.f32 %v1821, %v1566
        %v1823 = vmax.f32 %v1822, %v1567
        %v1824 = vmax.f32 %v1823, %v1568
        %v1825 = vmax.f32 %v1824, %v1569
        %v1826 = vmax.f32 %v1825, %v1570
        %v1827 = vmax.f32 %v1826, %v1571
        %v1828 = vmax.f32 %v1827, %v1572
        %v1829 = vmax.f32 %v1828, %v1573
        %v1830 = vmax.f32 %v1829, %v1574
        %v1831 = vmax.f32 %v1830, %v1575
        %v1832 = vmax.f32 %v1831, %v1576
        %v1833 = vmax.f32 %v1832, %v1577
        %v1834 = vmax.f32 %v1833, %v1578
        %v1835 = vrot.slane %v1834, 4
        %v1836 = vmax.f32 %v1834, %v1835
        %v1837 = vrot.slane %v1836, 2
        %v1838 = vmax.f32 %v1836, %v1837
        %v1839 = vrot.slane %v1838, 1
        %v1840 = vmax.f32 %v1838, %v1839
        %v1841 = vmax.f32 %v1579, %v1580
        %v1842 = vmax.f32 %v1841, %v1581
        %v1843 = vmax.f32 %v1842, %v1582
        %v1844 = vmax.f32 %v1843, %v1583
        %v1845 = vmax.f32 %v1844, %v1584
        %v1846 = vmax.f32 %v1845, %v1585
        %v1847 = vmax.f32 %v1846, %v1586
        %v1848 = vmax.f32 %v1847, %v1587
        %v1849 = vmax.f32 %v1848, %v1588
        %v1850 = vmax.f32 %v1849, %v1589
        %v1851 = vmax.f32 %v1850, %v1590
        %v1852 = vmax.f32 %v1851, %v1591
        %v1853 = vmax.f32 %v1852, %v1592
        %v1854 = vmax.f32 %v1853, %v1593
        %v1855 = vmax.f32 %v1854, %v1594
        %v1856 = vmax.f32 %v1855, %v1595
        %v1857 = vmax.f32 %v1856, %v1596
        %v1858 = vmax.f32 %v1857, %v1597
        %v1859 = vmax.f32 %v1858, %v1598
        %v1860 = vmax.f32 %v1859, %v1599
        %v1861 = vmax.f32 %v1860, %v1600
        %v1862 = vmax.f32 %v1861, %v1601
        %v1863 = vmax.f32 %v1862, %v1602
        %v1864 = vmax.f32 %v1863, %v1603
        %v1865 = vmax.f32 %v1864, %v1604
        %v1866 = vmax.f32 %v1865, %v1605
        %v1867 = vmax.f32 %v1866, %v1606
        %v1868 = vmax.f32 %v1867, %v1607
        %v1869 = vmax.f32 %v1868, %v1608
        %v1870 = vmax.f32 %v1869, %v1609
        %v1871 = vmax.f32 %v1870, %v1610
        %v1872 = vrot.slane %v1871, 4
        %v1873 = vmax.f32 %v1871, %v1872
        %v1874 = vrot.slane %v1873, 2
        %v1875 = vmax.f32 %v1873, %v1874
        %v1876 = vrot.slane %v1875, 1
        %v1877 = vmax.f32 %v1875, %v1876
        %v1878 = vmax.f32 %v1611, %v1612
        %v1879 = vmax.f32 %v1878, %v1613
        %v1880 = vmax.f32 %v1879, %v1614
        %v1881 = vmax.f32 %v1880, %v1615
        %v1882 = vmax.f32 %v1881, %v1616
        %v1883 = vmax.f32 %v1882, %v1617
        %v1884 = vmax.f32 %v1883, %v1618
        %v1885 = vmax.f32 %v1884, %v1619
        %v1886 = vmax.f32 %v1885, %v1620
        %v1887 = vmax.f32 %v1886, %v1621
        %v1888 = vmax.f32 %v1887, %v1622
        %v1889 = vmax.f32 %v1888, %v1623
        %v1890 = vmax.f32 %v1889, %v1624
        %v1891 = vmax.f32 %v1890, %v1625
        %v1892 = vmax.f32 %v1891, %v1626
        %v1893 = vmax.f32 %v1892, %v1627
        %v1894 = vmax.f32 %v1893, %v1628
        %v1895 = vmax.f32 %v1894, %v1629
        %v1896 = vmax.f32 %v1895, %v1630
        %v1897 = vmax.f32 %v1896, %v1631
        %v1898 = vmax.f32 %v1897, %v1632
        %v1899 = vmax.f32 %v1898, %v1633
        %v1900 = vmax.f32 %v1899, %v1634
        %v1901 = vmax.f32 %v1900, %v1635
        %v1902 = vmax.f32 %v1901, %v1636
        %v1903 = vmax.f32 %v1902, %v1637
        %v1904 = vmax.f32 %v1903, %v1638
        %v1905 = vmax.f32 %v1904, %v1639
        %v1906 = vmax.f32 %v1905, %v1640
        %v1907 = vmax.f32 %v1906, %v1641
        %v1908 = vmax.f32 %v1907, %v1642
        %v1909 = vrot.slane %v1908, 4
        %v1910 = vmax.f32 %v1908, %v1909
        %v1911 = vrot.slane %v1910, 2
        %v1912 = vmax.f32 %v1910, %v1911
        %v1913 = vrot.slane %v1912, 1
        %v1914 = vmax.f32 %v1912, %v1913
        %v1915 = vmax.f32 %v1643, %v1644
        %v1916 = vmax.f32 %v1915, %v1645
        %v1917 = vmax.f32 %v1916, %v1646
        %v1918 = vmax.f32 %v1917, %v1647
        %v1919 = vmax.f32 %v1918, %v1648
        %v1920 = vmax.f32 %v1919, %v1649
        %v1921 = vmax.f32 %v1920, %v1650
        %v1922 = vmax.f32 %v1921, %v1651
        %v1923 = vmax.f32 %v1922, %v1652
        %v1924 = vmax.f32 %v1923, %v1653
        %v1925 = vmax.f32 %v1924, %v1654
        %v1926 = vmax.f32 %v1925, %v1655
        %v1927 = vmax.f32 %v1926, %v1656
        %v1928 = vmax.f32 %v1927, %v1657
        %v1929 = vmax.f32 %v1928, %v1658
        %v1930 = vmax.f32 %v1929, %v1659
        %v1931 = vmax.f32 %v1930, %v1660
        %v1932 = vmax.f32 %v1931, %v1661
        %v1933 = vmax.f32 %v1932, %v1662
        %v1934 = vmax.f32 %v1933, %v1663
        %v1935 = vmax.f32 %v1934, %v1664
        %v1936 = vmax.f32 %v1935, %v1665
        %v1937 = vmax.f32 %v1936, %v1666
        %v1938 = vmax.f32 %v1937, %v1667
        %v1939 = vmax.f32 %v1938, %v1668
        %v1940 = vmax.f32 %v1939, %v1669
        %v1941 = vmax.f32 %v1940, %v1670
        %v1942 = vmax.f32 %v1941, %v1671
        %v1943 = vmax.f32 %v1942, %v1672
        %v1944 = vmax.f32 %v1943, %v1673
        %v1945 = vmax.f32 %v1944, %v1674
        %v1946 = vrot.slane %v1945, 4
        %v1947 = vmax.f32 %v1945, %v1946
        %v1948 = vrot.slane %v1947, 2
        %v1949 = vmax.f32 %v1947, %v1948
        %v1950 = vrot.slane %v1949, 1
        %v1951 = vmax.f32 %v1949, %v1950
        %v1952 = vmax.f32 %v1675, %v1676
        %v1953 = vmax.f32 %v1952, %v1677
        %v1954 = vmax.f32 %v1953, %v1678
        %v1955 = vmax.f32 %v1954, %v1679
        %v1956 = vmax.f32 %v1955, %v1680
        %v1957 = vmax.f32 %v1956, %v1681
        %v1958 = vmax.f32 %v1957, %v1682
        %v1959 = vmax.f32 %v1958, %v1683
        %v1960 = vmax.f32 %v1959, %v1684
        %v1961 = vmax.f32 %v1960, %v1685
        %v1962 = vmax.f32 %v1961, %v1686
        %v1963 = vmax.f32 %v1962, %v1687
        %v1964 = vmax.f32 %v1963, %v1688
        %v1965 = vmax.f32 %v1964, %v1689
        %v1966 = vmax.f32 %v1965, %v1690
        %v1967 = vmax.f32 %v1966, %v1691
        %v1968 = vmax.f32 %v1967, %v1692
        %v1969 = vmax.f32 %v1968, %v1693
        %v1970 = vmax.f32 %v1969, %v1694
        %v1971 = vmax.f32 %v1970, %v1695
        %v1972 = vmax.f32 %v1971, %v1696
        %v1973 = vmax.f32 %v1972, %v1697
        %v1974 = vmax.f32 %v1973, %v1698
        %v1975 = vmax.f32 %v1974, %v1699
        %v1976 = vmax.f32 %v1975, %v1700
        %v1977 = vmax.f32 %v1976, %v1701
        %v1978 = vmax.f32 %v1977, %v1702
        %v1979 = vmax.f32 %v1978, %v1703
        %v1980 = vmax.f32 %v1979, %v1704
        %v1981 = vmax.f32 %v1980, %v1705
        %v1982 = vmax.f32 %v1981, %v1706
        %v1983 = vrot.slane %v1982, 4
        %v1984 = vmax.f32 %v1982, %v1983
        %v1985 = vrot.slane %v1984, 2
        %v1986 = vmax.f32 %v1984, %v1985
        %v1987 = vrot.slane %v1986, 1
        %v1988 = vmax.f32 %v1986, %v1987
        %v1989 = vmax.f32 %v1707, %v1708
        %v1990 = vmax.f32 %v1989, %v1709
        %v1991 = vmax.f32 %v1990, %v1710
        %v1992 = vmax.f32 %v1991, %v1711
        %v1993 = vmax.f32 %v1992, %v1712
        %v1994 = vmax.f32 %v1993, %v1713
        %v1995 = vmax.f32 %v1994, %v1714
        %v1996 = vmax.f32 %v1995, %v1715
        %v1997 = vmax.f32 %v1996, %v1716
        %v1998 = vmax.f32 %v1997, %v1717
        %v1999 = vmax.f32 %v1998, %v1718
        %v2000 = vmax.f32 %v1999, %v1719
        %v2001 = vmax.f32 %v2000, %v1720
        %v2002 = vmax.f32 %v2001, %v1721
        %v2003 = vmax.f32 %v2002, %v1722
        %v2004 = vmax.f32 %v2003, %v1723
        %v2005 = vmax.f32 %v2004, %v1724
        %v2006 = vmax.f32 %v2005, %v1725
        %v2007 = vmax.f32 %v2006, %v1726
        %v2008 = vmax.f32 %v2007, %v1727
        %v2009 = vmax.f32 %v2008, %v1728
        %v2010 = vmax.f32 %v2009, %v1729
        %v2011 = vmax.f32 %v2010, %v1730
        %v2012 = vmax.f32 %v2011, %v1731
        %v2013 = vmax.f32 %v2012, %v1732
        %v2014 = vmax.f32 %v2013, %v1733
        %v2015 = vmax.f32 %v2014, %v1734
        %v2016 = vmax.f32 %v2015, %v1735
        %v2017 = vmax.f32 %v2016, %v1736
        %v2018 = vmax.f32 %v2017, %v1737
        %v2019 = vmax.f32 %v2018, %v1738
        %v2020 = vrot.slane %v2019, 4
        %v2021 = vmax.f32 %v2019, %v2020
        %v2022 = vrot.slane %v2021, 2
        %v2023 = vmax.f32 %v2021, %v2022
        %v2024 = vrot.slane %v2023, 1
        %v2025 = vmax.f32 %v2023, %v2024
        %v2026 = vmax.f32 %v1739, %v1740
        %v2027 = vmax.f32 %v2026, %v1741
        %v2028 = vmax.f32 %v2027, %v1742
        %v2029 = vmax.f32 %v2028, %v1743
        %v2030 = vmax.f32 %v2029, %v1744
        %v2031 = vmax.f32 %v2030, %v1745
        %v2032 = vmax.f32 %v2031, %v1746
        %v2033 = vmax.f32 %v2032, %v1747
        %v2034 = vmax.f32 %v2033, %v1748
        %v2035 = vmax.f32 %v2034, %v1749
        %v2036 = vmax.f32 %v2035, %v1750
        %v2037 = vmax.f32 %v2036, %v1751
        %v2038 = vmax.f32 %v2037, %v1752
        %v2039 = vmax.f32 %v2038, %v1753
        %v2040 = vmax.f32 %v2039, %v1754
        %v2041 = vmax.f32 %v2040, %v1755
        %v2042 = vmax.f32 %v2041, %v1756
        %v2043 = vmax.f32 %v2042, %v1757
        %v2044 = vmax.f32 %v2043, %v1758
        %v2045 = vmax.f32 %v2044, %v1759
        %v2046 = vmax.f32 %v2045, %v1760
        %v2047 = vmax.f32 %v2046, %v1761
        %v2048 = vmax.f32 %v2047, %v1762
        %v2049 = vmax.f32 %v2048, %v1763
        %v2050 = vmax.f32 %v2049, %v1764
        %v2051 = vmax.f32 %v2050, %v1765
        %v2052 = vmax.f32 %v2051, %v1766
        %v2053 = vmax.f32 %v2052, %v1767
        %v2054 = vmax.f32 %v2053, %v1768
        %v2055 = vmax.f32 %v2054, %v1769
        %v2056 = vmax.f32 %v2055, %v1770
        %v2057 = vrot.slane %v2056, 4
        %v2058 = vmax.f32 %v2056, %v2057
        %v2059 = vrot.slane %v2058, 2
        %v2060 = vmax.f32 %v2058, %v2059
        %v2061 = vrot.slane %v2060, 1
        %v2062 = vmax.f32 %v2060, %v2061
        %v2063 = vmax.f32 %v1771, %v1772
        %v2064 = vmax.f32 %v2063, %v1773
        %v2065 = vmax.f32 %v2064, %v1774
        %v2066 = vmax.f32 %v2065, %v1775
        %v2067 = vmax.f32 %v2066, %v1776
        %v2068 = vmax.f32 %v2067, %v1777
        %v2069 = vmax.f32 %v2068, %v1778
        %v2070 = vmax.f32 %v2069, %v1779
        %v2071 = vmax.f32 %v2070, %v1780
        %v2072 = vmax.f32 %v2071, %v1781
        %v2073 = vmax.f32 %v2072, %v1782
        %v2074 = vmax.f32 %v2073, %v1783
        %v2075 = vmax.f32 %v2074, %v1784
        %v2076 = vmax.f32 %v2075, %v1785
        %v2077 = vmax.f32 %v2076, %v1786
        %v2078 = vmax.f32 %v2077, %v1787
        %v2079 = vmax.f32 %v2078, %v1788
        %v2080 = vmax.f32 %v2079, %v1789
        %v2081 = vmax.f32 %v2080, %v1790
        %v2082 = vmax.f32 %v2081, %v1791
        %v2083 = vmax.f32 %v2082, %v1792
        %v2084 = vmax.f32 %v2083, %v1793
        %v2085 = vmax.f32 %v2084, %v1794
        %v2086 = vmax.f32 %v2085, %v1795
        %v2087 = vmax.f32 %v2086, %v1796
        %v2088 = vmax.f32 %v2087, %v1797
        %v2089 = vmax.f32 %v2088, %v1798
        %v2090 = vmax.f32 %v2089, %v1799
        %v2091 = vmax.f32 %v2090, %v1800
        %v2092 = vmax.f32 %v2091, %v1801
        %v2093 = vmax.f32 %v2092, %v1802
        %v2094 = vrot.slane %v2093, 4
        %v2095 = vmax.f32 %v2093, %v2094
        %v2096 = vrot.slane %v2095, 2
        %v2097 = vmax.f32 %v2095, %v2096
        %v2098 = vrot.slane %v2097, 1
        %v2099 = vmax.f32 %v2097, %v2098
        %vm2108 = vcmask 1041409
        %v2109 = vsel %vm2108, %v1877, %v1840
        %vm2110 = vcmask 1042434
        %v2111 = vsel %vm2110, %v1914, %v2109
        %vm2112 = vcmask 1043459
        %v2113 = vsel %vm2112, %v1951, %v2111
        %vm2114 = vcmask 1044484
        %v2115 = vsel %vm2114, %v1988, %v2113
        %vm2116 = vcmask 1045509
        %v2117 = vsel %vm2116, %v2025, %v2115
        %vm2118 = vcmask 1046534
        %v2119 = vsel %vm2118, %v2062, %v2117
        %vm2120 = vcmask 1047559
        %v2121 = vsel %vm2120, %v2099, %v2119
        %v2123 = vmax.f32 %v1803, %v2121
        %2124 = vst [vmem:[#allocation2] sm:$0xff] %v2123
        // Predicated region
        $region33: #{tpu_custom_call.1} parent=27 // pred_check
          %p2125 = pneg %p238
        $region34: #{tpu_custom_call.1} parent=27 // pred_check_branch
          %2127 = sbr.rel (%p2125) target = $region36
        $region35: #{tpu_custom_call.1} parent=27 // pred_region
          %v2128 = vld [vmem:[#allocation2] sm:$0xff]
          %2129 = vst [vmem:[%s213] sm:$0xff] %v2128
        $region36: #{tpu_custom_call.1} parent=27 // pred_fallthru
          _
        %s2130 = sand.u32 %s112, 1
        %s2131 = scalar_lea.sflag [#allocation5], %s2130
        %s2132 = sand.u32 %s112, 1
        %s2133 = smul.addr %s2132, 8
        %s2134 = scalar_lea.vmem [#allocation4], %s2133
        // Predicated region
        $region37: #{tpu_custom_call.1} parent=27 // pred_check
          %p2135 = pneg %p122
        $region38: #{tpu_custom_call.1} parent=27 // pred_check_branch
          %2137 = sbr.rel (%p2135) target = $region40
        $region39: #{tpu_custom_call.1} parent=27 // pred_region
          %s2139 = ssub.s32 128, 128
          %2140 = vsyncadd %s2131, %s2139
          %s2141 = sadd.s32 %s23, %s24
          %s2142 = sadd.s32 %s2141, %s22
          %s2143 = smul.addr %s2142, 128
          %s2144 = scalar_lea.hbm %s2, %s2143
          %s2146 = sshll.u32 %s2134, 4
          %s2147 = int_to_ptr.vmem [resolvable:$true] %s2146
          %2149 = dma.vmem_to_hbm [thread:$0]  %s2147, 128, %s2144, %s2131
        $region40: #{tpu_custom_call.1} parent=27 // pred_fallthru
          _
      $region28: #{tpu_custom_call.1} parent=5 // pred_fallthru
        _
      %p2150 = scmp.le.s32.totalorder 2, %s11
      // Predicated region
      $region41: #{tpu_custom_call.1} parent=5 // pred_check
        %p2151 = pneg %p2150
      $region42: #{tpu_custom_call.1} parent=5 // pred_check_branch
        %2153 = sbr.rel (%p2151) target = $region44
      $region43: #{tpu_custom_call.1} parent=5 // pred_region
        %s2154 = ssub.s32 %s11, 2
        // Predicated region
        $region45: #{tpu_custom_call.1} parent=43 // pred_check
          %p2155 = pneg %p128
        $region46: #{tpu_custom_call.1} parent=43 // pred_check_branch
          %2157 = sbr.rel (%p2155) target = $region48
        $region47: #{tpu_custom_call.1} parent=43 // pred_region
          %s2158 = sand.u32 %s113, 1
          %s2159 = scalar_lea.sflag [#allocation5], %s2158
          %s2160 = sand.u32 %s113, 1
          %s2161 = smul.addr %s2160, 8
          %s2162 = scalar_lea.vmem [#allocation4], %s2161
          %2163 = dma.done %s2159, 128
        $region48: #{tpu_custom_call.1} parent=43 // pred_fallthru
          _
      $region44: #{tpu_custom_call.1} parent=5 // pred_fallthru
        _
    $region6: #{tpu_custom_call.1} parent=1 // loop_footer
      %s15 = sadd.s32 1, %s11
    $region7: #{tpu_custom_call.1} parent=1 // loop_footer_branch
      %10 = sbr.rel target = $region3
    $region8: #{tpu_custom_call.1} parent=1 // loop_exit
      _
    %2164 = vsyncpa [#allocation5], 1
    %s2165 = scalar_lea.sflag [#allocation5], 1
    %2166 = vsyncpa %s2165, 1

</llo_original>
